<compile_context>
chip_gen: v5e
topology: v5e:2x2
jax: 0.10.0
libtpu: 0.0.40
codegen_flags: <defaults>
</compile_context>

<pallas_src>
import jax
import jax.numpy as jnp
import numpy as np
from jax import lax
from jax.experimental import pallas as pl
from jax.experimental.pallas import tpu as pltpu


# ------------------------------ fused kernel --------------------------------

def disc_fused_kernel(p1_ref, w1g_ref, b1_ref, g2_ref, b2_ref,
                      fw1_ref, fb1_ref, fw2_ref, fb2_ref, o_ref):
    n_batch = o_ref.shape[0]
    f32 = jnp.float32

    # ---- conv1 (4 pool-position matmuls) + maxpool 2x2 + bias + relu --------
    # p1_ref[p] : (n*12, 300)  rows = n*12+j, cols = k*12+i  (k = ky*5+kx)
    # w1g       : (300, 96)    block-diagonal over i, cols = ic*12+i
    w1g = w1g_ref[...]
    c1 = None
    for p in range(4):
        cp = jnp.dot(p1_ref[p], w1g, preferred_element_type=f32)   # (n*12, 96)
        c1 = cp if c1 is None else jnp.maximum(c1, cp)
    # h1[n*12+y, ic*12+x] = relu(maxpool2(conv1)+b1)
    h1 = jnp.maximum(c1 + b1_ref[...], 0.0)                         # (n*12, 96)

    # ---- conv2 (5 banded matmuls / sample) + bias + maxpool 2x2 + relu ------
    # g2_ref[ky] : (96, 64)  rows = ic*12+xin, cols = qx*32 + oc*4 + u (X=2u+qx)
    a2 = []
    for n in range(n_batch):
        acc = jnp.zeros((8, 64), f32)
        for ky in range(5):
            lhs = h1[n * 12 + ky: n * 12 + ky + 8, :]               # (8, 96)
            acc = acc + jnp.dot(lhs, g2_ref[ky], preferred_element_type=f32)
        y2 = acc + b2_ref[...]                                      # (8, 64) [Y, qx*32+oc*4+u]
        # pool over Y (row pairs), then over X-parity qx (lane halves), then relu
        rows = [jnp.maximum(y2[2 * v:2 * v + 1, :], y2[2 * v + 1:2 * v + 2, :])
                for v in range(4)]
        p2 = jnp.concatenate(rows, axis=0)                          # (4, 64)
        a2.append(jnp.maximum(jnp.maximum(p2[:, 0:32], p2[:, 32:64]), 0.0))  # (4, 32)

    # ---- fc1 + relu + (dropout = identity) + fc2 + sigmoid ------------------
    # fw1_ref[v] : (32, 10)  rows = oc*4+u, matching a2 columns
    h = jnp.zeros((n_batch, 10), f32)
    for v in range(4):
        rowv = jnp.concatenate([a2[n][v:v + 1, :] for n in range(n_batch)],
                               axis=0)                              # (N, 32)
        h = h + jnp.dot(rowv, fw1_ref[v], preferred_element_type=f32)
    h = jnp.maximum(h + fb1_ref[...], 0.0)
    # TODO(synk): F.dropout(p=0.5) is only active in training mode; inference => identity.
    z = jnp.dot(h, fw2_ref[...], preferred_element_type=f32) + fb2_ref[...]   # (N, 1)
    ez = jnp.exp(-jnp.abs(z))                                       # stable sigmoid
    o_ref[...] = jnp.where(z >= 0.0, 1.0 / (1.0 + ez), ez / (1.0 + ez))


# --------------------------------- wrapper ----------------------------------

@jax.jit
def discriminator_forward(x_nchw, params):
    w1, b1, w2, b2, fw1, fb1, fw2, fb2 = params
    n = x_nchw.shape[0]
    x = x_nchw.astype(jnp.float32)[:, 0]                            # (N, 28, 28)

    # -- conv1 im2col with the 2x2 pool position split into a leading dim -----
    # p1[p, n*12+j, k*12+i] = x[n, 2j+py+ky, 2i+px+kx],  p = py*2+px, k = ky*5+kx
    blocks = []
    for py in range(2):
        for px in range(2):
            taps = []
            for ky in range(5):
                for kx in range(5):
                    taps.append(lax.slice(x, (0, py + ky, px + kx),
                                          (n, py + ky + 23, px + kx + 23),
                                          (1, 2, 2)))               # (N,12,12)
            t = jnp.stack(taps, axis=0)                             # (25,N,12,12)
            t = jnp.transpose(t, (1, 2, 0, 3))                      # (N,12,25,12)
            blocks.append(t.reshape(n * 12, 25 * 12))               # (24,300)
    p1 = jnp.stack(blocks, axis=0)                                  # (4,24,300)

    # -- conv1 weights as block-diagonal matrix; bias as a row ----------------
    w1f = w1.reshape(8, 25).astype(jnp.float32)                     # [oc, k]
    eye12 = jnp.eye(12, dtype=jnp.float32)
    # w1g[k*12+i_in, oc*12+i_out] = w1f[oc,k] * (i_in == i_out)
    w1g = (w1f.T[:, None, :, None] * eye12[None, :, None, :]).reshape(300, 96)
    b1row = jnp.repeat(b1.astype(jnp.float32), 12)[None, :]         # (1,96)

    # -- conv2 as 5 banded matrices (one per ky), with X-parity split ---------
    # g2[ky, ic*12+xin, qx*32+oc*4+u] = sum_kx w2[oc,ic,ky,kx] * [xin == 2u+qx+kx]
    sel = np.zeros((5, 12, 2, 4), np.float32)
    for kx in range(5):
        for qx in range(2):
            for u in range(4):
                sel[kx, 2 * u + qx + kx, qx, u] = 1.0
    g2 = jnp.einsum('oiyk,kxqu->yixqou', w2.astype(jnp.float32),
                    jnp.asarray(sel)).reshape(5, 96, 64)
    b2row = jnp.tile(jnp.repeat(b2.astype(jnp.float32), 4), 2)[None, :]   # (1,64)

    # -- fc weights, reordered to match the (v, oc*4+u) activation layout -----
    fw1r = (fw1.astype(jnp.float32).reshape(10, 8, 4, 4)            # [j,oc,v,u]
            .transpose(2, 1, 3, 0).reshape(4, 32, 10))              # [v, oc*4+u, j]
    fb1r = fb1.astype(jnp.float32).reshape(1, 10)
    fw2r = fw2.astype(jnp.float32).T                                # (10,1)
    fb2r = fb2.astype(jnp.float32).reshape(1, 1)

    out = pl.pallas_call(
        disc_fused_kernel,
        out_shape=jax.ShapeDtypeStruct((n, 1), jnp.float32),
        grid=(1,),
        in_specs=[
            pl.BlockSpec((4, 12 * n, 300), lambda i: (0, 0, 0)),
            pl.BlockSpec((300, 96), lambda i: (0, 0)),
            pl.BlockSpec((1, 96), lambda i: (0, 0)),
            pl.BlockSpec((5, 96, 64), lambda i: (0, 0, 0)),
            pl.BlockSpec((1, 64), lambda i: (0, 0)),
            pl.BlockSpec((4, 32, 10), lambda i: (0, 0, 0)),
            pl.BlockSpec((1, 10), lambda i: (0, 0)),
            pl.BlockSpec((10, 1), lambda i: (0, 0)),
            pl.BlockSpec((1, 1), lambda i: (0, 0)),
        ],
        out_specs=pl.BlockSpec((n, 1), lambda i: (0, 0)),
        compiler_params=pltpu.CompilerParams(dimension_semantics=("arbitrary",)),
    )(p1, w1g, b1row, g2, b2row, fw1r, fb1r, fw2r, fb2r)
    return out


# ------------------------- params & float64 reference -----------------------

def init_params(key):
    ks = jax.random.split(key, 8)
    w1 = 0.2 * jax.random.normal(ks[0], (8, 1, 5, 5), jnp.float32)   # conv1.weight
    b1 = 0.1 * jax.random.normal(ks[1], (8,), jnp.float32)           # conv1.bias
    w2 = 0.1 * jax.random.normal(ks[2], (8, 8, 5, 5), jnp.float32)   # conv2.weight
    b2 = 0.1 * jax.random.normal(ks[3], (8,), jnp.float32)           # conv2.bias
    fw1 = 0.1 * jax.random.normal(ks[4], (10, 128), jnp.float32)     # fc1.weight
    fb1 = 0.1 * jax.random.normal(ks[5], (10,), jnp.float32)         # fc1.bias
    fw2 = 0.1 * jax.random.normal(ks[6], (1, 10), jnp.float32)       # fc2.weight
    fb2 = 0.1 * jax.random.normal(ks[7], (1,), jnp.float32)          # fc2.bias
    return (w1, b1, w2, b2, fw1, fb1, fw2, fb2)


def ref_forward_np(x, params):
    """Pure numpy float64 reference of the PyTorch forward."""
    w1, b1, w2, b2, fw1, fb1, fw2, fb2 = [np.asarray(p, np.float64) for p in params]
    x = np.asarray(x, np.float64)
    n = x.shape[0]
    y1 = np.zeros((n, 8, 24, 24))
    for ky in range(5):
        for kx in range(5):
            y1 += w1[:, 0, ky, kx][None, :, None, None] * \
                  x[:, 0, ky:ky + 24, kx:kx + 24][:, None]
    y1 += b1[None, :, None, None]
    h1 = np.maximum(y1.reshape(n, 8, 12, 2, 12, 2).max(axis=(3, 5)), 0.0)
    y2 = np.zeros((n, 8, 8, 8))
    for ky in range(5):
        for kx in range(5):
            y2 += np.einsum('oi,nihw->nohw', w2[:, :, ky, kx],
                            h1[:, :, ky:ky + 8, kx:kx + 8])
    y2 += b2[None, :, None, None]
    h2 = np.maximum(y2.reshape(n, 8, 4, 2, 4, 2).max(axis=(3, 5)), 0.0).reshape(n, 128)
    h = np.maximum(h2 @ fw1.T + fb1, 0.0)
    z = h @ fw2.T + fb2
    return 1.0 / (1.0 + np.exp(-z))


if __name__ == "__main__":
    key = jax.random.PRNGKey(0)
    pkey, xkey = jax.random.split(key)
    params = init_params(pkey)
    # fc1 expects 4*4*8 features => input spatial size must be 28x28 (MNIST-like).
    x = jax.random.normal(xkey, (2, 1, 28, 28), jnp.float32)   # NCHW
    out = jax.block_until_ready(discriminator_forward(x, params))
    ref = ref_forward_np(np.asarray(x), params)
    assert out.shape == (2, 1)
    np.testing.assert_allclose(np.asarray(out), ref, rtol=1e-3, atol=1e-3)
    print("KERNEL_OK")
</pallas_src>

<mosaic_0001>
module attributes {stable_mosaic.version = 11 : i64} {
  func.func @disc_fused_kernel(%arg0: i32, %arg1: memref<4x24x300xf32, #tpu.memory_space<vmem>>, %arg2: memref<300x96xf32, #tpu.memory_space<vmem>>, %arg3: memref<1x96xf32, #tpu.memory_space<vmem>>, %arg4: memref<5x96x64xf32, #tpu.memory_space<vmem>>, %arg5: memref<1x64xf32, #tpu.memory_space<vmem>>, %arg6: memref<4x32x10xf32, #tpu.memory_space<vmem>>, %arg7: memref<1x10xf32, #tpu.memory_space<vmem>>, %arg8: memref<10x1xf32, #tpu.memory_space<vmem>>, %arg9: memref<1x1xf32, #tpu.memory_space<vmem>>, %arg10: memref<2x1xf32, #tpu.memory_space<vmem>>) attributes {dimension_semantics = [#tpu.dimension_semantics<arbitrary>], iteration_bounds = array<i64: 1>, scalar_prefetch = 0 : i64, scratch_operands = 0 : i64, tpu.core_type = #tpu.core_type<tc>, window_params = [{pipeline_mode = #tpu.pipeline_mode<synchronous>, transform_indices = @transform_0, window_bounds = array<i64: 4, 24, 300>}, {pipeline_mode = #tpu.pipeline_mode<synchronous>, transform_indices = @transform_1, window_bounds = array<i64: 300, 96>}, {pipeline_mode = #tpu.pipeline_mode<synchronous>, transform_indices = @transform_2, window_bounds = array<i64: 1, 96>}, {pipeline_mode = #tpu.pipeline_mode<synchronous>, transform_indices = @transform_3, window_bounds = array<i64: 5, 96, 64>}, {pipeline_mode = #tpu.pipeline_mode<synchronous>, transform_indices = @transform_4, window_bounds = array<i64: 1, 64>}, {pipeline_mode = #tpu.pipeline_mode<synchronous>, transform_indices = @transform_5, window_bounds = array<i64: 4, 32, 10>}, {pipeline_mode = #tpu.pipeline_mode<synchronous>, transform_indices = @transform_6, window_bounds = array<i64: 1, 10>}, {pipeline_mode = #tpu.pipeline_mode<synchronous>, transform_indices = @transform_7, window_bounds = array<i64: 10, 1>}, {pipeline_mode = #tpu.pipeline_mode<synchronous>, transform_indices = @transform_8, window_bounds = array<i64: 1, 1>}, {pipeline_mode = #tpu.pipeline_mode<synchronous>, transform_indices = @transform_9, window_bounds = array<i64: 2, 1>}]} {
    %c0 = arith.constant 0 : index
    %c0_0 = arith.constant 0 : index
    %0 = vector.load %arg2[%c0, %c0_0] : memref<300x96xf32, #tpu.memory_space<vmem>>, vector<300x96xf32>
    %c0_1 = arith.constant 0 : index
    %c0_2 = arith.constant 0 : index
    %c0_3 = arith.constant 0 : index
    %1 = vector.load %arg1[%c0_1, %c0_2, %c0_3] : memref<4x24x300xf32, #tpu.memory_space<vmem>>, vector<1x24x300xf32>
    %2 = vector.shape_cast %1 : vector<1x24x300xf32> to vector<24x300xf32>
    %cst = arith.constant dense<0.000000e+00> : vector<24x96xf32>
    %3 = tpu.matmul %2, %0, %cst {dimension_numbers = #tpu.dot_dimension_numbers<[1], [0], [0], [1], [0, 0, 1, 1], [], []>} : vector<24x300xf32>, vector<300x96xf32>, vector<24x96xf32> -> vector<24x96xf32>
    %c1 = arith.constant 1 : index
    %c0_4 = arith.constant 0 : index
    %c0_5 = arith.constant 0 : index
    %4 = vector.load %arg1[%c1, %c0_4, %c0_5] : memref<4x24x300xf32, #tpu.memory_space<vmem>>, vector<1x24x300xf32>
    %5 = vector.shape_cast %4 : vector<1x24x300xf32> to vector<24x300xf32>
    %cst_6 = arith.constant dense<0.000000e+00> : vector<24x96xf32>
    %6 = tpu.matmul %5, %0, %cst_6 {dimension_numbers = #tpu.dot_dimension_numbers<[1], [0], [0], [1], [0, 0, 1, 1], [], []>} : vector<24x300xf32>, vector<300x96xf32>, vector<24x96xf32> -> vector<24x96xf32>
    %7 = arith.maximumf %3, %6 : vector<24x96xf32>
    %c2 = arith.constant 2 : index
    %c0_7 = arith.constant 0 : index
    %c0_8 = arith.constant 0 : index
    %8 = vector.load %arg1[%c2, %c0_7, %c0_8] : memref<4x24x300xf32, #tpu.memory_space<vmem>>, vector<1x24x300xf32>
    %9 = vector.shape_cast %8 : vector<1x24x300xf32> to vector<24x300xf32>
    %cst_9 = arith.constant dense<0.000000e+00> : vector<24x96xf32>
    %10 = tpu.matmul %9, %0, %cst_9 {dimension_numbers = #tpu.dot_dimension_numbers<[1], [0], [0], [1], [0, 0, 1, 1], [], []>} : vector<24x300xf32>, vector<300x96xf32>, vector<24x96xf32> -> vector<24x96xf32>
    %11 = arith.maximumf %7, %10 : vector<24x96xf32>
    %c3 = arith.constant 3 : index
    %c0_10 = arith.constant 0 : index
    %c0_11 = arith.constant 0 : index
    %12 = vector.load %arg1[%c3, %c0_10, %c0_11] : memref<4x24x300xf32, #tpu.memory_space<vmem>>, vector<1x24x300xf32>
    %13 = vector.shape_cast %12 : vector<1x24x300xf32> to vector<24x300xf32>
    %cst_12 = arith.constant dense<0.000000e+00> : vector<24x96xf32>
    %14 = tpu.matmul %13, %0, %cst_12 {dimension_numbers = #tpu.dot_dimension_numbers<[1], [0], [0], [1], [0, 0, 1, 1], [], []>} : vector<24x300xf32>, vector<300x96xf32>, vector<24x96xf32> -> vector<24x96xf32>
    %15 = arith.maximumf %11, %14 : vector<24x96xf32>
    %c0_13 = arith.constant 0 : index
    %c0_14 = arith.constant 0 : index
    %16 = vector.load %arg3[%c0_13, %c0_14] : memref<1x96xf32, #tpu.memory_space<vmem>>, vector<1x96xf32>
    %17 = vector.broadcast %16 : vector<1x96xf32> to vector<24x96xf32>
    %18 = arith.addf %15, %17 : vector<24x96xf32>
    %cst_15 = arith.constant 0.000000e+00 : f32
    %19 = vector.broadcast %cst_15 : f32 to vector<24x96xf32>
    %20 = arith.maximumf %18, %19 : vector<24x96xf32>
    %cst_16 = arith.constant 0.000000e+00 : f32
    %21 = vector.broadcast %cst_16 : f32 to vector<8x64xf32>
    %22 = vector.extract_strided_slice %20 {offsets = [0, 0], sizes = [8, 96], strides = [1, 1]} : vector<24x96xf32> to vector<8x96xf32>
    %c0_17 = arith.constant 0 : index
    %c0_18 = arith.constant 0 : index
    %c0_19 = arith.constant 0 : index
    %23 = vector.load %arg4[%c0_17, %c0_18, %c0_19] : memref<5x96x64xf32, #tpu.memory_space<vmem>>, vector<1x96x64xf32>
    %24 = vector.shape_cast %23 : vector<1x96x64xf32> to vector<96x64xf32>
    %cst_20 = arith.constant dense<0.000000e+00> : vector<8x64xf32>
    %25 = tpu.matmul %22, %24, %cst_20 {dimension_numbers = #tpu.dot_dimension_numbers<[1], [0], [0], [1], [0, 0, 1, 1], [], []>} : vector<8x96xf32>, vector<96x64xf32>, vector<8x64xf32> -> vector<8x64xf32>
    %26 = arith.addf %21, %25 : vector<8x64xf32>
    %27 = vector.extract_strided_slice %20 {offsets = [1, 0], sizes = [8, 96], strides = [1, 1]} : vector<24x96xf32> to vector<8x96xf32>
    %c1_21 = arith.constant 1 : index
    %c0_22 = arith.constant 0 : index
    %c0_23 = arith.constant 0 : index
    %28 = vector.load %arg4[%c1_21, %c0_22, %c0_23] : memref<5x96x64xf32, #tpu.memory_space<vmem>>, vector<1x96x64xf32>
    %29 = vector.shape_cast %28 : vector<1x96x64xf32> to vector<96x64xf32>
    %cst_24 = arith.constant dense<0.000000e+00> : vector<8x64xf32>
    %30 = tpu.matmul %27, %29, %cst_24 {dimension_numbers = #tpu.dot_dimension_numbers<[1], [0], [0], [1], [0, 0, 1, 1], [], []>} : vector<8x96xf32>, vector<96x64xf32>, vector<8x64xf32> -> vector<8x64xf32>
    %31 = arith.addf %26, %30 : vector<8x64xf32>
    %32 = vector.extract_strided_slice %20 {offsets = [2, 0], sizes = [8, 96], strides = [1, 1]} : vector<24x96xf32> to vector<8x96xf32>
    %c2_25 = arith.constant 2 : index
    %c0_26 = arith.constant 0 : index
    %c0_27 = arith.constant 0 : index
    %33 = vector.load %arg4[%c2_25, %c0_26, %c0_27] : memref<5x96x64xf32, #tpu.memory_space<vmem>>, vector<1x96x64xf32>
    %34 = vector.shape_cast %33 : vector<1x96x64xf32> to vector<96x64xf32>
    %cst_28 = arith.constant dense<0.000000e+00> : vector<8x64xf32>
    %35 = tpu.matmul %32, %34, %cst_28 {dimension_numbers = #tpu.dot_dimension_numbers<[1], [0], [0], [1], [0, 0, 1, 1], [], []>} : vector<8x96xf32>, vector<96x64xf32>, vector<8x64xf32> -> vector<8x64xf32>
    %36 = arith.addf %31, %35 : vector<8x64xf32>
    %37 = vector.extract_strided_slice %20 {offsets = [3, 0], sizes = [8, 96], strides = [1, 1]} : vector<24x96xf32> to vector<8x96xf32>
    %c3_29 = arith.constant 3 : index
    %c0_30 = arith.constant 0 : index
    %c0_31 = arith.constant 0 : index
    %38 = vector.load %arg4[%c3_29, %c0_30, %c0_31] : memref<5x96x64xf32, #tpu.memory_space<vmem>>, vector<1x96x64xf32>
    %39 = vector.shape_cast %38 : vector<1x96x64xf32> to vector<96x64xf32>
    %cst_32 = arith.constant dense<0.000000e+00> : vector<8x64xf32>
    %40 = tpu.matmul %37, %39, %cst_32 {dimension_numbers = #tpu.dot_dimension_numbers<[1], [0], [0], [1], [0, 0, 1, 1], [], []>} : vector<8x96xf32>, vector<96x64xf32>, vector<8x64xf32> -> vector<8x64xf32>
    %41 = arith.addf %36, %40 : vector<8x64xf32>
    %42 = vector.extract_strided_slice %20 {offsets = [4, 0], sizes = [8, 96], strides = [1, 1]} : vector<24x96xf32> to vector<8x96xf32>
    %c4 = arith.constant 4 : index
    %c0_33 = arith.constant 0 : index
    %c0_34 = arith.constant 0 : index
    %43 = vector.load %arg4[%c4, %c0_33, %c0_34] : memref<5x96x64xf32, #tpu.memory_space<vmem>>, vector<1x96x64xf32>
    %44 = vector.shape_cast %43 : vector<1x96x64xf32> to vector<96x64xf32>
    %cst_35 = arith.constant dense<0.000000e+00> : vector<8x64xf32>
    %45 = tpu.matmul %42, %44, %cst_35 {dimension_numbers = #tpu.dot_dimension_numbers<[1], [0], [0], [1], [0, 0, 1, 1], [], []>} : vector<8x96xf32>, vector<96x64xf32>, vector<8x64xf32> -> vector<8x64xf32>
    %46 = arith.addf %41, %45 : vector<8x64xf32>
    %c0_36 = arith.constant 0 : index
    %c0_37 = arith.constant 0 : index
    %47 = vector.load %arg5[%c0_36, %c0_37] : memref<1x64xf32, #tpu.memory_space<vmem>>, vector<1x64xf32>
    %48 = vector.broadcast %47 : vector<1x64xf32> to vector<8x64xf32>
    %49 = arith.addf %46, %48 : vector<8x64xf32>
    %50 = vector.extract_strided_slice %49 {offsets = [0, 0], sizes = [1, 64], strides = [1, 1]} : vector<8x64xf32> to vector<1x64xf32>
    %51 = vector.extract_strided_slice %49 {offsets = [1, 0], sizes = [1, 64], strides = [1, 1]} : vector<8x64xf32> to vector<1x64xf32>
    %52 = arith.maximumf %50, %51 : vector<1x64xf32>
    %53 = vector.extract_strided_slice %49 {offsets = [2, 0], sizes = [1, 64], strides = [1, 1]} : vector<8x64xf32> to vector<1x64xf32>
    %54 = vector.extract_strided_slice %49 {offsets = [3, 0], sizes = [1, 64], strides = [1, 1]} : vector<8x64xf32> to vector<1x64xf32>
    %55 = arith.maximumf %53, %54 : vector<1x64xf32>
    %56 = vector.extract_strided_slice %49 {offsets = [4, 0], sizes = [1, 64], strides = [1, 1]} : vector<8x64xf32> to vector<1x64xf32>
    %57 = vector.extract_strided_slice %49 {offsets = [5, 0], sizes = [1, 64], strides = [1, 1]} : vector<8x64xf32> to vector<1x64xf32>
    %58 = arith.maximumf %56, %57 : vector<1x64xf32>
    %59 = vector.extract_strided_slice %49 {offsets = [6, 0], sizes = [1, 64], strides = [1, 1]} : vector<8x64xf32> to vector<1x64xf32>
    %60 = vector.extract_strided_slice %49 {offsets = [7, 0], sizes = [1, 64], strides = [1, 1]} : vector<8x64xf32> to vector<1x64xf32>
    %61 = arith.maximumf %59, %60 : vector<1x64xf32>
    %62 = tpu.concatenate %52, %55, %58, %61 in 0 : vector<1x64xf32>, vector<1x64xf32>, vector<1x64xf32>, vector<1x64xf32> -> vector<4x64xf32>
    %63 = vector.extract_strided_slice %62 {offsets = [0, 0], sizes = [4, 32], strides = [1, 1]} : vector<4x64xf32> to vector<4x32xf32>
    %64 = vector.extract_strided_slice %62 {offsets = [0, 32], sizes = [4, 32], strides = [1, 1]} : vector<4x64xf32> to vector<4x32xf32>
    %65 = arith.maximumf %63, %64 : vector<4x32xf32>
    %cst_38 = arith.constant 0.000000e+00 : f32
    %66 = vector.broadcast %cst_38 : f32 to vector<4x32xf32>
    %67 = arith.maximumf %65, %66 : vector<4x32xf32>
    %cst_39 = arith.constant 0.000000e+00 : f32
    %68 = vector.broadcast %cst_39 : f32 to vector<8x64xf32>
    %69 = vector.extract_strided_slice %20 {offsets = [12, 0], sizes = [8, 96], strides = [1, 1]} : vector<24x96xf32> to vector<8x96xf32>
    %c0_40 = arith.constant 0 : index
    %c0_41 = arith.constant 0 : index
    %c0_42 = arith.constant 0 : index
    %70 = vector.load %arg4[%c0_40, %c0_41, %c0_42] : memref<5x96x64xf32, #tpu.memory_space<vmem>>, vector<1x96x64xf32>
    %71 = vector.shape_cast %70 : vector<1x96x64xf32> to vector<96x64xf32>
    %cst_43 = arith.constant dense<0.000000e+00> : vector<8x64xf32>
    %72 = tpu.matmul %69, %71, %cst_43 {dimension_numbers = #tpu.dot_dimension_numbers<[1], [0], [0], [1], [0, 0, 1, 1], [], []>} : vector<8x96xf32>, vector<96x64xf32>, vector<8x64xf32> -> vector<8x64xf32>
    %73 = arith.addf %68, %72 : vector<8x64xf32>
    %74 = vector.extract_strided_slice %20 {offsets = [13, 0], sizes = [8, 96], strides = [1, 1]} : vector<24x96xf32> to vector<8x96xf32>
    %c1_44 = arith.constant 1 : index
    %c0_45 = arith.constant 0 : index
    %c0_46 = arith.constant 0 : index
    %75 = vector.load %arg4[%c1_44, %c0_45, %c0_46] : memref<5x96x64xf32, #tpu.memory_space<vmem>>, vector<1x96x64xf32>
    %76 = vector.shape_cast %75 : vector<1x96x64xf32> to vector<96x64xf32>
    %cst_47 = arith.constant dense<0.000000e+00> : vector<8x64xf32>
    %77 = tpu.matmul %74, %76, %cst_47 {dimension_numbers = #tpu.dot_dimension_numbers<[1], [0], [0], [1], [0, 0, 1, 1], [], []>} : vector<8x96xf32>, vector<96x64xf32>, vector<8x64xf32> -> vector<8x64xf32>
    %78 = arith.addf %73, %77 : vector<8x64xf32>
    %79 = vector.extract_strided_slice %20 {offsets = [14, 0], sizes = [8, 96], strides = [1, 1]} : vector<24x96xf32> to vector<8x96xf32>
    %c2_48 = arith.constant 2 : index
    %c0_49 = arith.constant 0 : index
    %c0_50 = arith.constant 0 : index
    %80 = vector.load %arg4[%c2_48, %c0_49, %c0_50] : memref<5x96x64xf32, #tpu.memory_space<vmem>>, vector<1x96x64xf32>
    %81 = vector.shape_cast %80 : vector<1x96x64xf32> to vector<96x64xf32>
    %cst_51 = arith.constant dense<0.000000e+00> : vector<8x64xf32>
    %82 = tpu.matmul %79, %81, %cst_51 {dimension_numbers = #tpu.dot_dimension_numbers<[1], [0], [0], [1], [0, 0, 1, 1], [], []>} : vector<8x96xf32>, vector<96x64xf32>, vector<8x64xf32> -> vector<8x64xf32>
    %83 = arith.addf %78, %82 : vector<8x64xf32>
    %84 = vector.extract_strided_slice %20 {offsets = [15, 0], sizes = [8, 96], strides = [1, 1]} : vector<24x96xf32> to vector<8x96xf32>
    %c3_52 = arith.constant 3 : index
    %c0_53 = arith.constant 0 : index
    %c0_54 = arith.constant 0 : index
    %85 = vector.load %arg4[%c3_52, %c0_53, %c0_54] : memref<5x96x64xf32, #tpu.memory_space<vmem>>, vector<1x96x64xf32>
    %86 = vector.shape_cast %85 : vector<1x96x64xf32> to vector<96x64xf32>
    %cst_55 = arith.constant dense<0.000000e+00> : vector<8x64xf32>
    %87 = tpu.matmul %84, %86, %cst_55 {dimension_numbers = #tpu.dot_dimension_numbers<[1], [0], [0], [1], [0, 0, 1, 1], [], []>} : vector<8x96xf32>, vector<96x64xf32>, vector<8x64xf32> -> vector<8x64xf32>
    %88 = arith.addf %83, %87 : vector<8x64xf32>
    %89 = vector.extract_strided_slice %20 {offsets = [16, 0], sizes = [8, 96], strides = [1, 1]} : vector<24x96xf32> to vector<8x96xf32>
    %c4_56 = arith.constant 4 : index
    %c0_57 = arith.constant 0 : index
    %c0_58 = arith.constant 0 : index
    %90 = vector.load %arg4[%c4_56, %c0_57, %c0_58] : memref<5x96x64xf32, #tpu.memory_space<vmem>>, vector<1x96x64xf32>
    %91 = vector.shape_cast %90 : vector<1x96x64xf32> to vector<96x64xf32>
    %cst_59 = arith.constant dense<0.000000e+00> : vector<8x64xf32>
    %92 = tpu.matmul %89, %91, %cst_59 {dimension_numbers = #tpu.dot_dimension_numbers<[1], [0], [0], [1], [0, 0, 1, 1], [], []>} : vector<8x96xf32>, vector<96x64xf32>, vector<8x64xf32> -> vector<8x64xf32>
    %93 = arith.addf %88, %92 : vector<8x64xf32>
    %c0_60 = arith.constant 0 : index
    %c0_61 = arith.constant 0 : index
    %94 = vector.load %arg5[%c0_60, %c0_61] : memref<1x64xf32, #tpu.memory_space<vmem>>, vector<1x64xf32>
    %95 = vector.broadcast %94 : vector<1x64xf32> to vector<8x64xf32>
    %96 = arith.addf %93, %95 : vector<8x64xf32>
    %97 = vector.extract_strided_slice %96 {offsets = [0, 0], sizes = [1, 64], strides = [1, 1]} : vector<8x64xf32> to vector<1x64xf32>
    %98 = vector.extract_strided_slice %96 {offsets = [1, 0], sizes = [1, 64], strides = [1, 1]} : vector<8x64xf32> to vector<1x64xf32>
    %99 = arith.maximumf %97, %98 : vector<1x64xf32>
    %100 = vector.extract_strided_slice %96 {offsets = [2, 0], sizes = [1, 64], strides = [1, 1]} : vector<8x64xf32> to vector<1x64xf32>
    %101 = vector.extract_strided_slice %96 {offsets = [3, 0], sizes = [1, 64], strides = [1, 1]} : vector<8x64xf32> to vector<1x64xf32>
    %102 = arith.maximumf %100, %101 : vector<1x64xf32>
    %103 = vector.extract_strided_slice %96 {offsets = [4, 0], sizes = [1, 64], strides = [1, 1]} : vector<8x64xf32> to vector<1x64xf32>
    %104 = vector.extract_strided_slice %96 {offsets = [5, 0], sizes = [1, 64], strides = [1, 1]} : vector<8x64xf32> to vector<1x64xf32>
    %105 = arith.maximumf %103, %104 : vector<1x64xf32>
    %106 = vector.extract_strided_slice %96 {offsets = [6, 0], sizes = [1, 64], strides = [1, 1]} : vector<8x64xf32> to vector<1x64xf32>
    %107 = vector.extract_strided_slice %96 {offsets = [7, 0], sizes = [1, 64], strides = [1, 1]} : vector<8x64xf32> to vector<1x64xf32>
    %108 = arith.maximumf %106, %107 : vector<1x64xf32>
    %109 = tpu.concatenate %99, %102, %105, %108 in 0 : vector<1x64xf32>, vector<1x64xf32>, vector<1x64xf32>, vector<1x64xf32> -> vector<4x64xf32>
    %110 = vector.extract_strided_slice %109 {offsets = [0, 0], sizes = [4, 32], strides = [1, 1]} : vector<4x64xf32> to vector<4x32xf32>
    %111 = vector.extract_strided_slice %109 {offsets = [0, 32], sizes = [4, 32], strides = [1, 1]} : vector<4x64xf32> to vector<4x32xf32>
    %112 = arith.maximumf %110, %111 : vector<4x32xf32>
    %cst_62 = arith.constant 0.000000e+00 : f32
    %113 = vector.broadcast %cst_62 : f32 to vector<4x32xf32>
    %114 = arith.maximumf %112, %113 : vector<4x32xf32>
    %cst_63 = arith.constant 0.000000e+00 : f32
    %115 = vector.broadcast %cst_63 : f32 to vector<2x10xf32>
    %116 = vector.extract_strided_slice %67 {offsets = [0, 0], sizes = [1, 32], strides = [1, 1]} : vector<4x32xf32> to vector<1x32xf32>
    %117 = vector.extract_strided_slice %114 {offsets = [0, 0], sizes = [1, 32], strides = [1, 1]} : vector<4x32xf32> to vector<1x32xf32>
    %118 = tpu.concatenate %116, %117 in 0 : vector<1x32xf32>, vector<1x32xf32> -> vector<2x32xf32>
    %c0_64 = arith.constant 0 : index
    %c0_65 = arith.constant 0 : index
    %c0_66 = arith.constant 0 : index
    %119 = vector.load %arg6[%c0_64, %c0_65, %c0_66] : memref<4x32x10xf32, #tpu.memory_space<vmem>>, vector<1x32x10xf32>
    %120 = vector.shape_cast %119 : vector<1x32x10xf32> to vector<32x10xf32>
    %cst_67 = arith.constant dense<0.000000e+00> : vector<2x10xf32>
    %121 = tpu.matmul %118, %120, %cst_67 {dimension_numbers = #tpu.dot_dimension_numbers<[1], [0], [0], [1], [0, 0, 1, 1], [], []>} : vector<2x32xf32>, vector<32x10xf32>, vector<2x10xf32> -> vector<2x10xf32>
    %122 = arith.addf %115, %121 : vector<2x10xf32>
    %123 = vector.extract_strided_slice %67 {offsets = [1, 0], sizes = [1, 32], strides = [1, 1]} : vector<4x32xf32> to vector<1x32xf32>
    %124 = vector.extract_strided_slice %114 {offsets = [1, 0], sizes = [1, 32], strides = [1, 1]} : vector<4x32xf32> to vector<1x32xf32>
    %125 = tpu.concatenate %123, %124 in 0 : vector<1x32xf32>, vector<1x32xf32> -> vector<2x32xf32>
    %c1_68 = arith.constant 1 : index
    %c0_69 = arith.constant 0 : index
    %c0_70 = arith.constant 0 : index
    %126 = vector.load %arg6[%c1_68, %c0_69, %c0_70] : memref<4x32x10xf32, #tpu.memory_space<vmem>>, vector<1x32x10xf32>
    %127 = vector.shape_cast %126 : vector<1x32x10xf32> to vector<32x10xf32>
    %cst_71 = arith.constant dense<0.000000e+00> : vector<2x10xf32>
    %128 = tpu.matmul %125, %127, %cst_71 {dimension_numbers = #tpu.dot_dimension_numbers<[1], [0], [0], [1], [0, 0, 1, 1], [], []>} : vector<2x32xf32>, vector<32x10xf32>, vector<2x10xf32> -> vector<2x10xf32>
    %129 = arith.addf %122, %128 : vector<2x10xf32>
    %130 = vector.extract_strided_slice %67 {offsets = [2, 0], sizes = [1, 32], strides = [1, 1]} : vector<4x32xf32> to vector<1x32xf32>
    %131 = vector.extract_strided_slice %114 {offsets = [2, 0], sizes = [1, 32], strides = [1, 1]} : vector<4x32xf32> to vector<1x32xf32>
    %132 = tpu.concatenate %130, %131 in 0 : vector<1x32xf32>, vector<1x32xf32> -> vector<2x32xf32>
    %c2_72 = arith.constant 2 : index
    %c0_73 = arith.constant 0 : index
    %c0_74 = arith.constant 0 : index
    %133 = vector.load %arg6[%c2_72, %c0_73, %c0_74] : memref<4x32x10xf32, #tpu.memory_space<vmem>>, vector<1x32x10xf32>
    %134 = vector.shape_cast %133 : vector<1x32x10xf32> to vector<32x10xf32>
    %cst_75 = arith.constant dense<0.000000e+00> : vector<2x10xf32>
    %135 = tpu.matmul %132, %134, %cst_75 {dimension_numbers = #tpu.dot_dimension_numbers<[1], [0], [0], [1], [0, 0, 1, 1], [], []>} : vector<2x32xf32>, vector<32x10xf32>, vector<2x10xf32> -> vector<2x10xf32>
    %136 = arith.addf %129, %135 : vector<2x10xf32>
    %137 = vector.extract_strided_slice %67 {offsets = [3, 0], sizes = [1, 32], strides = [1, 1]} : vector<4x32xf32> to vector<1x32xf32>
    %138 = vector.extract_strided_slice %114 {offsets = [3, 0], sizes = [1, 32], strides = [1, 1]} : vector<4x32xf32> to vector<1x32xf32>
    %139 = tpu.concatenate %137, %138 in 0 : vector<1x32xf32>, vector<1x32xf32> -> vector<2x32xf32>
    %c3_76 = arith.constant 3 : index
    %c0_77 = arith.constant 0 : index
    %c0_78 = arith.constant 0 : index
    %140 = vector.load %arg6[%c3_76, %c0_77, %c0_78] : memref<4x32x10xf32, #tpu.memory_space<vmem>>, vector<1x32x10xf32>
    %141 = vector.shape_cast %140 : vector<1x32x10xf32> to vector<32x10xf32>
    %cst_79 = arith.constant dense<0.000000e+00> : vector<2x10xf32>
    %142 = tpu.matmul %139, %141, %cst_79 {dimension_numbers = #tpu.dot_dimension_numbers<[1], [0], [0], [1], [0, 0, 1, 1], [], []>} : vector<2x32xf32>, vector<32x10xf32>, vector<2x10xf32> -> vector<2x10xf32>
    %143 = arith.addf %136, %142 : vector<2x10xf32>
    %c0_80 = arith.constant 0 : index
    %c0_81 = arith.constant 0 : index
    %144 = vector.load %arg7[%c0_80, %c0_81] : memref<1x10xf32, #tpu.memory_space<vmem>>, vector<1x10xf32>
    %145 = vector.broadcast %144 : vector<1x10xf32> to vector<2x10xf32>
    %146 = arith.addf %143, %145 : vector<2x10xf32>
    %cst_82 = arith.constant 0.000000e+00 : f32
    %147 = vector.broadcast %cst_82 : f32 to vector<2x10xf32>
    %148 = arith.maximumf %146, %147 : vector<2x10xf32>
    %c0_83 = arith.constant 0 : index
    %c0_84 = arith.constant 0 : index
    %149 = vector.load %arg8[%c0_83, %c0_84] : memref<10x1xf32, #tpu.memory_space<vmem>>, vector<10x1xf32>
    %cst_85 = arith.constant dense<0.000000e+00> : vector<2x1xf32>
    %150 = tpu.matmul %148, %149, %cst_85 {dimension_numbers = #tpu.dot_dimension_numbers<[1], [0], [0], [1], [0, 0, 1, 1], [], []>} : vector<2x10xf32>, vector<10x1xf32>, vector<2x1xf32> -> vector<2x1xf32>
    %c0_86 = arith.constant 0 : index
    %c0_87 = arith.constant 0 : index
    %151 = vector.load %arg9[%c0_86, %c0_87] : memref<1x1xf32, #tpu.memory_space<vmem>>, vector<1x1xf32>
    %152 = vector.broadcast %151 : vector<1x1xf32> to vector<2x1xf32>
    %153 = arith.addf %150, %152 : vector<2x1xf32>
    %154 = math.absf %153 : vector<2x1xf32>
    %cst_88 = arith.constant 0.000000e+00 : f32
    %155 = vector.broadcast %cst_88 : f32 to vector<2x1xf32>
    %156 = arith.subf %155, %154 : vector<2x1xf32>
    %157 = math.exp %156 : vector<2x1xf32>
    %cst_89 = arith.constant 0.000000e+00 : f32
    %158 = vector.broadcast %cst_89 : f32 to vector<2x1xf32>
    %159 = arith.cmpf oge, %153, %158 : vector<2x1xf32>
    %cst_90 = arith.constant 1.000000e+00 : f32
    %160 = vector.broadcast %cst_90 : f32 to vector<2x1xf32>
    %161 = arith.addf %160, %157 : vector<2x1xf32>
    %cst_91 = arith.constant 1.000000e+00 : f32
    %162 = vector.broadcast %cst_91 : f32 to vector<2x1xf32>
    %163 = arith.divf %162, %161 : vector<2x1xf32>
    %cst_92 = arith.constant 1.000000e+00 : f32
    %164 = vector.broadcast %cst_92 : f32 to vector<2x1xf32>
    %165 = arith.addf %164, %157 : vector<2x1xf32>
    %166 = arith.divf %157, %165 : vector<2x1xf32>
    %167 = arith.select %159, %163, %166 : vector<2x1xi1>, vector<2x1xf32>
    %c0_93 = arith.constant 0 : index
    %c0_94 = arith.constant 0 : index
    %168 = vector.load %arg10[%c0_93, %c0_94] : memref<2x1xf32, #tpu.memory_space<vmem>>, vector<2x1xf32>
    tpu.vector_store %arg10[%c0_93, %c0_94], %167 {strides = array<i32>} : memref<2x1xf32, #tpu.memory_space<vmem>>, vector<2x1xf32>,
    return
  }
  func.func @transform_0(%arg0: i32) -> (i32, i32, i32) {
    %c0_i32 = arith.constant 0 : i32
    %c0_i32_0 = arith.constant 0 : i32
    %c0_i32_1 = arith.constant 0 : i32
    %c0_i32_2 = arith.constant 0 : i32
    return %c0_i32, %c0_i32_0, %c0_i32_1 : i32, i32, i32
  }
  func.func @transform_1(%arg0: i32) -> (i32, i32) {
    %c0_i32 = arith.constant 0 : i32
    %c0_i32_0 = arith.constant 0 : i32
    %c0_i32_1 = arith.constant 0 : i32
    return %c0_i32, %c0_i32_0 : i32, i32
  }
  func.func @transform_2(%arg0: i32) -> (i32, i32) {
    %c0_i32 = arith.constant 0 : i32
    %c0_i32_0 = arith.constant 0 : i32
    %c0_i32_1 = arith.constant 0 : i32
    return %c0_i32, %c0_i32_0 : i32, i32
  }
  func.func @transform_3(%arg0: i32) -> (i32, i32, i32) {
    %c0_i32 = arith.constant 0 : i32
    %c0_i32_0 = arith.constant 0 : i32
    %c0_i32_1 = arith.constant 0 : i32
    %c0_i32_2 = arith.constant 0 : i32
    return %c0_i32, %c0_i32_0, %c0_i32_1 : i32, i32, i32
  }
  func.func @transform_4(%arg0: i32) -> (i32, i32) {
    %c0_i32 = arith.constant 0 : i32
    %c0_i32_0 = arith.constant 0 : i32
    %c0_i32_1 = arith.constant 0 : i32
    return %c0_i32, %c0_i32_0 : i32, i32
  }
  func.func @transform_5(%arg0: i32) -> (i32, i32, i32) {
    %c0_i32 = arith.constant 0 : i32
    %c0_i32_0 = arith.constant 0 : i32
    %c0_i32_1 = arith.constant 0 : i32
    %c0_i32_2 = arith.constant 0 : i32
    return %c0_i32, %c0_i32_0, %c0_i32_1 : i32, i32, i32
  }
  func.func @transform_6(%arg0: i32) -> (i32, i32) {
    %c0_i32 = arith.constant 0 : i32
    %c0_i32_0 = arith.constant 0 : i32
    %c0_i32_1 = arith.constant 0 : i32
    return %c0_i32, %c0_i32_0 : i32, i32
  }
  func.func @transform_7(%arg0: i32) -> (i32, i32) {
    %c0_i32 = arith.constant 0 : i32
    %c0_i32_0 = arith.constant 0 : i32
    %c0_i32_1 = arith.constant 0 : i32
    return %c0_i32, %c0_i32_0 : i32, i32
  }
  func.func @transform_8(%arg0: i32) -> (i32, i32) {
    %c0_i32 = arith.constant 0 : i32
    %c0_i32_0 = arith.constant 0 : i32
    %c0_i32_1 = arith.constant 0 : i32
    return %c0_i32, %c0_i32_0 : i32, i32
  }
  func.func @transform_9(%arg0: i32) -> (i32, i32) {
    %c0_i32 = arith.constant 0 : i32
    %c0_i32_0 = arith.constant 0 : i32
    %c0_i32_1 = arith.constant 0 : i32
    return %c0_i32, %c0_i32_0 : i32, i32
  }
}

</mosaic_0001>

<llo_original>
// kernel: tile.5
$region0: #{tile.5}
  %s0 = inlined_call_operand.vmem [shape: f32[8,4], index: 0, kind: input, shape index: {}]
  %s1 = inlined_call_operand.vmem [shape: f32[32], index: 1, kind: output, shape index: {}]
  $region1: #{tile.5} parent=0
    #allocation0 [shape = 'u8[4096]{0}', space=vmem, size = 0x1000, scoped, tag = 'scoped mem for output reshape']
    %v2 = vld [vmem:[%s0] sm:$0x1]
    %vm3 = vcmask 31744
    %4 = vst.msk [vmem:[#allocation0] sm:$0x1] %vm3, %v2
    %s5 = scalar_lea.vmem %s0, 7
    %v6 = vld [vmem:[%s5] sm:$0x1]
    %7 = vrot.lane.b32.xlu0 %v6, 28
    %v8 = vpop.permute.xlu0 %7
    %vm9 = vcmask 261344
    %10 = vst.msk [vmem:[#allocation0] sm:$0x1] %vm9, %v8
    %s11 = scalar_lea.vmem %s0, 6
    %v12 = vld [vmem:[%s11] sm:$0x1]
    %13 = vrot.lane.b32.xlu0 %v12, 24
    %v14 = vpop.permute.xlu0 %13
    %vm15 = vcmask 228544
    %16 = vst.msk [vmem:[#allocation0] sm:$0x1] %vm15, %v14
    %s17 = scalar_lea.vmem %s0, 5
    %v18 = vld [vmem:[%s17] sm:$0x1]
    %19 = vrot.lane.b32.xlu0 %v18, 20
    %v20 = vpop.permute.xlu0 %19
    %vm21 = vcmask 195744
    %22 = vst.msk [vmem:[#allocation0] sm:$0x1] %vm21, %v20
    %s23 = scalar_lea.vmem %s0, 4
    %v24 = vld [vmem:[%s23] sm:$0x1]
    %25 = vrot.lane.b32.xlu0 %v24, 16
    %v26 = vpop.permute.xlu0 %25
    %vm27 = vcmask 162944
    %28 = vst.msk [vmem:[#allocation0] sm:$0x1] %vm27, %v26
    %s29 = scalar_lea.vmem %s0, 3
    %v30 = vld [vmem:[%s29] sm:$0x1]
    %31 = vrot.lane.b32.xlu0 %v30, 12
    %v32 = vpop.permute.xlu0 %31
    %vm33 = vcmask 130144
    %34 = vst.msk [vmem:[#allocation0] sm:$0x1] %vm33, %v32
    %s35 = scalar_lea.vmem %s0, 2
    %v36 = vld [vmem:[%s35] sm:$0x1]
    %37 = vrot.lane.b32.xlu0 %v36, 8
    %v38 = vpop.permute.xlu0 %37
    %vm39 = vcmask 97344
    %40 = vst.msk [vmem:[#allocation0] sm:$0x1] %vm39, %v38
    %s41 = scalar_lea.vmem %s0, 1
    %v42 = vld [vmem:[%s41] sm:$0x1]
    %43 = vrot.lane.b32.xlu0 %v42, 4
    %v44 = vpop.permute.xlu0 %43
    %vm45 = vcmask 64544
    %46 = vst.msk [vmem:[#allocation0] sm:$0x1] %vm45, %v44
    %s48 = ssub.s32 2, 1
    %v49 = vld [vmem:[#allocation0] sm:%s48]
    %s51 = ssub.s32 2, 1
    %52 = vst [vmem:[%s1] sm:%s51] %v49

// kernel: tile.6
$region0: #{tile.6}
  #allocation0 [shape = 's32[1]{0}', space=sflag, size = 0x4, scoped, tag = 'scoped memory for tile.6']
  %s0 = inlined_call_operand.vmem [shape: f32[32], index: 0, kind: input, shape index: {}]
  %s1 = inlined_call_operand.vmem [shape: f32[2,32], index: 1, kind: output, shape index: {}]
  // Predicated region
  $region2: #{tile.6} parent=0 // pred_check
    _
  $region3: #{tile.6} parent=0 // pred_check_branch
    %3 = sbr.rel (0) target = $region5
  $region4: #{tile.6} parent=0 // pred_region
    _
  $region5: #{tile.6} parent=0 // pred_fallthru
    _
  %v4 = vld [vmem:[%s0] ss:$0 sm:$0xff]
  %5 = vst [vmem:[%s1] sm:$0x3] %v4

// kernel: tile.7
$region0: #{tile.7}
  %s0 = inlined_call_operand.vmem [shape: f32[2,32], index: 0, kind: input, shape index: {}]
  %s1 = inlined_call_operand.vmem [shape: f32[1,64], index: 1, kind: output, shape index: {}]
  $region1: #{tile.7} parent=0
    #allocation0 [shape = 'u8[4096]{0}', space=vmem, size = 0x1000, scoped, tag = 'scoped mem for output reshape']
    #allocation1 [shape = 'u8[4096]{0}', space=vmem, size = 0x1000, scoped, tag = 'scoped mem for input reshape']
    %s3 = ssub.s32 4, 1
    %v4 = vld [vmem:[%s0] sm:%s3]
    %5 = vst [vmem:[#allocation1] sm:%s3] %v4
    %v6 = vld [vmem:[#allocation1] sm:$0x1]
    %vm7 = vcmask 261120
    %8 = vst.msk [vmem:[#allocation0] sm:$0x1] %vm7, %v6
    %s9 = scalar_lea.vmem [#allocation1], 1
    %v10 = vld [vmem:[%s9] sm:$0x1]
    %11 = vrot.lane.b32.xlu0 %v10, 32
    %v12 = vpop.permute.xlu0 %11
    %vm13 = vcmask 523520
    %14 = vst.msk [vmem:[#allocation0] sm:$0x1] %vm13, %v12
    %s16 = ssub.s32 2, 1
    %v17 = vld [vmem:[#allocation0] sm:%s16]
    %s19 = ssub.s32 2, 1
    %20 = vst [vmem:[%s1] sm:%s19] %v17

// kernel: discriminator_forward.1
$region0: #{discriminator_forward.1}
  #allocation0 [shape = 'u32[]', space=smem, size = 0x4, offset = 0x4, fixed_abs, tag = 'smem constant byte address 0x4 - core index']
  #allocation1 [shape = 'u32[72,128]{1,0:T(1,128)}', space=vmem, size = 0x9000, scoped, tag = 'internal scratch']
  #allocation2 [shape = 'f32[1,1]{1,0:T(1,128)S(1)}', space=vmem, size = 0x200, scoped, tag = 'scoped memory for discriminator_forward.1']
  %s0 = inlined_call_operand.vmem [shape: f32[4,24,300], index: 0, kind: input, shape index: {}]
  %s1 = inlined_call_operand.vmem [shape: f32[300,96], index: 1, kind: input, shape index: {}]
  %s2 = inlined_call_operand.vmem [shape: f32[1,96], index: 2, kind: input, shape index: {}]
  %s3 = inlined_call_operand.vmem [shape: f32[5,96,64], index: 3, kind: input, shape index: {}]
  %s4 = inlined_call_operand.vmem [shape: f32[1,64], index: 4, kind: input, shape index: {}]
  %s5 = inlined_call_operand.vmem [shape: f32[4,32,10], index: 5, kind: input, shape index: {}]
  %s6 = inlined_call_operand.vmem [shape: f32[1,10], index: 6, kind: input, shape index: {}]
  %s7 = inlined_call_operand.vmem [shape: f32[10,1], index: 7, kind: input, shape index: {}]
  %s8 = inlined_call_operand.<no memory space> [shape: f32[1,1], index: 8, kind: input, shape index: {}]
  %s9 = inlined_call_operand.vmem [shape: f32[2,1], index: 9, kind: output, shape index: {}]
  %s10 = sld [smem:[#allocation0]]
  $region46: #{discriminator_forward.1} parent=0
    _
  %s12 = ssub.s32 1, %s10
  %s13 = scalar_select 0, %s12, %s10
  %v14 = vstv %s8
  %15 = vst [vmem:[#allocation2] sm:$0x1] %v14
  // Predicated region
  $region2: #{discriminator_forward.1} parent=0 // pred_check
    _
  $region3: #{discriminator_forward.1} parent=0 // pred_check_branch
    %17 = sbr.rel (0) target = $region5
  $region4: #{discriminator_forward.1} parent=0 // pred_region
    _
  $region5: #{discriminator_forward.1} parent=0 // pred_fallthru
    _
  // Predicated region
  $region6: #{discriminator_forward.1} parent=0 // pred_check
    _
  $region7: #{discriminator_forward.1} parent=0 // pred_check_branch
    %19 = sbr.rel (0) target = $region9
  $region8: #{discriminator_forward.1} parent=0 // pred_region
    _
  $region9: #{discriminator_forward.1} parent=0 // pred_fallthru
    _
  // Predicated region
  $region10: #{discriminator_forward.1} parent=0 // pred_check
    _
  $region11: #{discriminator_forward.1} parent=0 // pred_check_branch
    %21 = sbr.rel (0) target = $region13
  $region12: #{discriminator_forward.1} parent=0 // pred_region
    _
  $region13: #{discriminator_forward.1} parent=0 // pred_fallthru
    _
  // Predicated region
  $region14: #{discriminator_forward.1} parent=0 // pred_check
    _
  $region15: #{discriminator_forward.1} parent=0 // pred_check_branch
    %23 = sbr.rel (0) target = $region17
  $region16: #{discriminator_forward.1} parent=0 // pred_region
    _
  $region17: #{discriminator_forward.1} parent=0 // pred_fallthru
    _
  // Predicated region
  $region18: #{discriminator_forward.1} parent=0 // pred_check
    _
  $region19: #{discriminator_forward.1} parent=0 // pred_check_branch
    %25 = sbr.rel (0) target = $region21
  $region20: #{discriminator_forward.1} parent=0 // pred_region
    _
  $region21: #{discriminator_forward.1} parent=0 // pred_fallthru
    _
  // Predicated region
  $region22: #{discriminator_forward.1} parent=0 // pred_check
    _
  $region23: #{discriminator_forward.1} parent=0 // pred_check_branch
    %27 = sbr.rel (0) target = $region25
  $region24: #{discriminator_forward.1} parent=0 // pred_region
    _
  $region25: #{discriminator_forward.1} parent=0 // pred_fallthru
    _
  // Predicated region
  $region26: #{discriminator_forward.1} parent=0 // pred_check
    _
  $region27: #{discriminator_forward.1} parent=0 // pred_check_branch
    %29 = sbr.rel (0) target = $region29
  $region28: #{discriminator_forward.1} parent=0 // pred_region
    _
  $region29: #{discriminator_forward.1} parent=0 // pred_fallthru
    _
  // Predicated region
  $region30: #{discriminator_forward.1} parent=0 // pred_check
    _
  $region31: #{discriminator_forward.1} parent=0 // pred_check_branch
    %31 = sbr.rel (0) target = $region33
  $region32: #{discriminator_forward.1} parent=0 // pred_region
    _
  $region33: #{discriminator_forward.1} parent=0 // pred_fallthru
    _
  // Predicated region
  $region34: #{discriminator_forward.1} parent=0 // pred_check
    _
  $region35: #{discriminator_forward.1} parent=0 // pred_check_branch
    %33 = sbr.rel (0) target = $region37
  $region36: #{discriminator_forward.1} parent=0 // pred_region
    _
  $region37: #{discriminator_forward.1} parent=0 // pred_fallthru
    _
  %v34 = vld [vmem:[%s1] sm:$0xff]
  %v35 = vld [vmem:[%s1 + $0x8] sm:$0xff]
  %v36 = vld [vmem:[%s1 + $0x10] sm:$0xff]
  %v37 = vld [vmem:[%s1 + $0x18] sm:$0xff]
  %v38 = vld [vmem:[%s1 + $0x20] sm:$0xff]
  %v39 = vld [vmem:[%s1 + $0x28] sm:$0xff]
  %v40 = vld [vmem:[%s1 + $0x30] sm:$0xff]
  %v41 = vld [vmem:[%s1 + $0x38] sm:$0xff]
  %v42 = vld [vmem:[%s1 + $0x40] sm:$0xff]
  %v43 = vld [vmem:[%s1 + $0x48] sm:$0xff]
  %v44 = vld [vmem:[%s1 + $0x50] sm:$0xff]
  %v45 = vld [vmem:[%s1 + $0x58] sm:$0xff]
  %v46 = vld [vmem:[%s1 + $0x60] sm:$0xff]
  %v47 = vld [vmem:[%s1 + $0x68] sm:$0xff]
  %v48 = vld [vmem:[%s1 + $0x70] sm:$0xff]
  %v49 = vld [vmem:[%s1 + $0x78] sm:$0xff]
  %v50 = vld [vmem:[%s1 + $0x80] sm:$0xff]
  %v51 = vld [vmem:[%s1 + $0x88] sm:$0xff]
  %v52 = vld [vmem:[%s1 + $0x90] sm:$0xff]
  %v53 = vld [vmem:[%s1 + $0x98] sm:$0xff]
  %v54 = vld [vmem:[%s1 + $0xa0] sm:$0xff]
  %v55 = vld [vmem:[%s1 + $0xa8] sm:$0xff]
  %v56 = vld [vmem:[%s1 + $0xb0] sm:$0xff]
  %v57 = vld [vmem:[%s1 + $0xb8] sm:$0xff]
  %v58 = vld [vmem:[%s1 + $0xc0] sm:$0xff]
  %v59 = vld [vmem:[%s1 + $0xc8] sm:$0xff]
  %v60 = vld [vmem:[%s1 + $0xd0] sm:$0xff]
  %v61 = vld [vmem:[%s1 + $0xd8] sm:$0xff]
  %v62 = vld [vmem:[%s1 + $0xe0] sm:$0xff]
  %v63 = vld [vmem:[%s1 + $0xe8] sm:$0xff]
  %v64 = vld [vmem:[%s1 + $0xf0] sm:$0xff]
  %v65 = vld [vmem:[%s1 + $0xf8] sm:$0xff]
  %v66 = vld [vmem:[%s1 + $0x100] sm:$0xff]
  %v67 = vld [vmem:[%s1 + $0x108] sm:$0xff]
  %v68 = vld [vmem:[%s1 + $0x110] sm:$0xff]
  %v69 = vld [vmem:[%s1 + $0x118] sm:$0xff]
  %v70 = vld [vmem:[%s1 + $0x120] sm:$0xff]
  %v71 = vld [vmem:[%s1 + $0x128] sm:$0xf]
  %v72 = vld [vmem:[%s0] sm:$0xff]
  %v73 = vld [vmem:[%s0 + $0x8] sm:$0xff]
  %v74 = vld [vmem:[%s0 + $0x10] sm:$0xff]
  %v75 = vld [vmem:[%s0 + $0x18] sm:$0xff]
  %v76 = vld [vmem:[%s0 + $0x20] sm:$0xff]
  %v77 = vld [vmem:[%s0 + $0x28] sm:$0xff]
  %v78 = vld [vmem:[%s0 + $0x30] sm:$0xff]
  %v79 = vld [vmem:[%s0 + $0x38] sm:$0xff]
  %v80 = vld [vmem:[%s0 + $0x40] sm:$0xff]
  %vm81 = vcmask 359424
  %v83 = vsel %vm81, %v74, 0
  %v86 = vsel %vm81, %v77, 0
  %v89 = vsel %vm81, %v80, 0
  %vm91 = vcmask 1043456
  %v93 = vsel %vm91, %v71, 0
  %95 = vmatpush.msra.mxu0 %v49
  %96 = vmatpush.msra.mxu0 %v48
  %97 = vmatpush.msra.mxu0 %v47
  %98 = vmatpush.msra.mxu0 %v46
  %99 = vmatpush.msra.mxu0 %v45
  %100 = vmatpush.msra.mxu0 %v44
  %101 = vmatpush.msra.mxu0 %v43
  %102 = vmatpush.msra.mxu0 %v42
  %103 = vmatpush.msra.mxu0 %v41
  %104 = vmatpush.msra.mxu0 %v40
  %105 = vmatpush.msra.mxu0 %v39
  %106 = vmatpush.msra.mxu0 %v38
  %107 = vmatpush.msra.mxu0 %v37
  %108 = vmatpush.msra.mxu0 %v36
  %109 = vmatpush.msra.mxu0 %v35
  %110 = vmatpush.msra.mxu0 %v34
  %111 = vmatmul.f32.gmra.mxu0 %v72
  %v112 = vpop.f32.mrf.mxu0
  %v113 = vadd.f32 0.0, %v112
  %114 = vmatmul.f32.gmra.mxu0 %v75
  %v115 = vpop.f32.mrf.mxu0
  %v116 = vadd.f32 0.0, %v115
  %117 = vmatmul.f32.gmra.mxu0 %v78
  %v118 = vpop.f32.mrf.mxu0
  %v119 = vadd.f32 0.0, %v118
  %120 = vdwg.mxu0
  %121 = vmatpush.msra.mxu0 %v65
  %122 = vmatpush.msra.mxu0 %v64
  %123 = vmatpush.msra.mxu0 %v63
  %124 = vmatpush.msra.mxu0 %v62
  %125 = vmatpush.msra.mxu0 %v61
  %126 = vmatpush.msra.mxu0 %v60
  %127 = vmatpush.msra.mxu0 %v59
  %128 = vmatpush.msra.mxu0 %v58
  %129 = vmatpush.msra.mxu0 %v57
  %130 = vmatpush.msra.mxu0 %v56
  %131 = vmatpush.msra.mxu0 %v55
  %132 = vmatpush.msra.mxu0 %v54
  %133 = vmatpush.msra.mxu0 %v53
  %134 = vmatpush.msra.mxu0 %v52
  %135 = vmatpush.msra.mxu0 %v51
  %136 = vmatpush.msra.mxu0 %v50
  %137 = vmatmul.f32.gmra.mxu0 %v73
  %v138 = vpop.f32.mrf.mxu0
  %v139 = vadd.f32 %v113, %v138
  %140 = vmatmul.f32.gmra.mxu0 %v76
  %v141 = vpop.f32.mrf.mxu0
  %v142 = vadd.f32 %v116, %v141
  %143 = vmatmul.f32.gmra.mxu0 %v79
  %v144 = vpop.f32.mrf.mxu0
  %v145 = vadd.f32 %v119, %v144
  %146 = vdwg.mxu0
  %147 = vmatpush.msra.mxu0 0.0
  %148 = vmatpush.msra.mxu0 0.0
  %149 = vmatpush.msra.mxu0 0.0
  %150 = vmatpush.msra.mxu0 0.0
  %151 = vmatpush.msra.mxu0 0.0
  %152 = vmatpush.msra.mxu0 0.0
  %153 = vmatpush.msra.mxu0 0.0
  %154 = vmatpush.msra.mxu0 0.0
  %155 = vmatpush.msra.mxu0 0.0
  %156 = vmatpush.msra.mxu0 0.0
  %157 = vmatpush.msra.mxu0 %v93
  %158 = vmatpush.msra.mxu0 %v70
  %159 = vmatpush.msra.mxu0 %v69
  %160 = vmatpush.msra.mxu0 %v68
  %161 = vmatpush.msra.mxu0 %v67
  %162 = vmatpush.msra.mxu0 %v66
  %163 = vmatmul.f32.gmra.mxu0 %v83
  %v164 = vpop.f32.mrf.mxu0
  %v165 = vadd.f32 %v139, %v164
  %166 = vmatmul.f32.gmra.mxu0 %v86
  %v167 = vpop.f32.mrf.mxu0
  %v168 = vadd.f32 %v142, %v167
  %169 = vmatmul.f32.gmra.mxu0 %v89
  %v170 = vpop.f32.mrf.mxu0
  %v171 = vadd.f32 %v145, %v170
  %172 = vdwg.mxu0
  %s173 = scalar_lea.vmem %s0, 72
  %v174 = vld [vmem:[%s173] sm:$0xff]
  %v175 = vld [vmem:[%s173 + $0x8] sm:$0xff]
  %v176 = vld [vmem:[%s173 + $0x10] sm:$0xff]
  %v177 = vld [vmem:[%s173 + $0x18] sm:$0xff]
  %v178 = vld [vmem:[%s173 + $0x20] sm:$0xff]
  %v179 = vld [vmem:[%s173 + $0x28] sm:$0xff]
  %v180 = vld [vmem:[%s173 + $0x30] sm:$0xff]
  %v181 = vld [vmem:[%s173 + $0x38] sm:$0xff]
  %v182 = vld [vmem:[%s173 + $0x40] sm:$0xff]
  %v184 = vsel %vm81, %v176, 0
  %v187 = vsel %vm81, %v179, 0
  %v190 = vsel %vm81, %v182, 0
  %192 = vmatpush.msra.mxu0 %v49
  %193 = vmatpush.msra.mxu0 %v48
  %194 = vmatpush.msra.mxu0 %v47
  %195 = vmatpush.msra.mxu0 %v46
  %196 = vmatpush.msra.mxu0 %v45
  %197 = vmatpush.msra.mxu0 %v44
  %198 = vmatpush.msra.mxu0 %v43
  %199 = vmatpush.msra.mxu0 %v42
  %200 = vmatpush.msra.mxu0 %v41
  %201 = vmatpush.msra.mxu0 %v40
  %202 = vmatpush.msra.mxu0 %v39
  %203 = vmatpush.msra.mxu0 %v38
  %204 = vmatpush.msra.mxu0 %v37
  %205 = vmatpush.msra.mxu0 %v36
  %206 = vmatpush.msra.mxu0 %v35
  %207 = vmatpush.msra.mxu0 %v34
  %208 = vmatmul.f32.gmra.mxu0 %v174
  %v209 = vpop.f32.mrf.mxu0
  %v210 = vadd.f32 0.0, %v209
  %211 = vmatmul.f32.gmra.mxu0 %v177
  %v212 = vpop.f32.mrf.mxu0
  %v213 = vadd.f32 0.0, %v212
  %214 = vmatmul.f32.gmra.mxu0 %v180
  %v215 = vpop.f32.mrf.mxu0
  %v216 = vadd.f32 0.0, %v215
  %217 = vdwg.mxu0
  %218 = vmatpush.msra.mxu0 %v65
  %219 = vmatpush.msra.mxu0 %v64
  %220 = vmatpush.msra.mxu0 %v63
  %221 = vmatpush.msra.mxu0 %v62
  %222 = vmatpush.msra.mxu0 %v61
  %223 = vmatpush.msra.mxu0 %v60
  %224 = vmatpush.msra.mxu0 %v59
  %225 = vmatpush.msra.mxu0 %v58
  %226 = vmatpush.msra.mxu0 %v57
  %227 = vmatpush.msra.mxu0 %v56
  %228 = vmatpush.msra.mxu0 %v55
  %229 = vmatpush.msra.mxu0 %v54
  %230 = vmatpush.msra.mxu0 %v53
  %231 = vmatpush.msra.mxu0 %v52
  %232 = vmatpush.msra.mxu0 %v51
  %233 = vmatpush.msra.mxu0 %v50
  %234 = vmatmul.f32.gmra.mxu0 %v175
  %v235 = vpop.f32.mrf.mxu0
  %v236 = vadd.f32 %v210, %v235
  %237 = vmatmul.f32.gmra.mxu0 %v178
  %v238 = vpop.f32.mrf.mxu0
  %v239 = vadd.f32 %v213, %v238
  %240 = vmatmul.f32.gmra.mxu0 %v181
  %v241 = vpop.f32.mrf.mxu0
  %v242 = vadd.f32 %v216, %v241
  %243 = vdwg.mxu0
  %244 = vmatpush.msra.mxu0 0.0
  %245 = vmatpush.msra.mxu0 0.0
  %246 = vmatpush.msra.mxu0 0.0
  %247 = vmatpush.msra.mxu0 0.0
  %248 = vmatpush.msra.mxu0 0.0
  %249 = vmatpush.msra.mxu0 0.0
  %250 = vmatpush.msra.mxu0 0.0
  %251 = vmatpush.msra.mxu0 0.0
  %252 = vmatpush.msra.mxu0 0.0
  %253 = vmatpush.msra.mxu0 0.0
  %254 = vmatpush.msra.mxu0 %v93
  %255 = vmatpush.msra.mxu0 %v70
  %256 = vmatpush.msra.mxu0 %v69
  %257 = vmatpush.msra.mxu0 %v68
  %258 = vmatpush.msra.mxu0 %v67
  %259 = vmatpush.msra.mxu0 %v66
  %260 = vmatmul.f32.gmra.mxu0 %v184
  %v261 = vpop.f32.mrf.mxu0
  %v262 = vadd.f32 %v236, %v261
  %263 = vmatmul.f32.gmra.mxu0 %v187
  %v264 = vpop.f32.mrf.mxu0
  %v265 = vadd.f32 %v239, %v264
  %266 = vmatmul.f32.gmra.mxu0 %v190
  %v267 = vpop.f32.mrf.mxu0
  %v268 = vadd.f32 %v242, %v267
  %269 = vdwg.mxu0
  %v270 = vmax.f32 %v165, %v262
  %v271 = vmax.f32 %v168, %v265
  %v272 = vmax.f32 %v171, %v268
  %s273 = scalar_lea.vmem %s0, 144
  %v274 = vld [vmem:[%s273] sm:$0xff]
  %v275 = vld [vmem:[%s273 + $0x8] sm:$0xff]
  %v276 = vld [vmem:[%s273 + $0x10] sm:$0xff]
  %v277 = vld [vmem:[%s273 + $0x18] sm:$0xff]
  %v278 = vld [vmem:[%s273 + $0x20] sm:$0xff]
  %v279 = vld [vmem:[%s273 + $0x28] sm:$0xff]
  %v280 = vld [vmem:[%s273 + $0x30] sm:$0xff]
  %v281 = vld [vmem:[%s273 + $0x38] sm:$0xff]
  %v282 = vld [vmem:[%s273 + $0x40] sm:$0xff]
  %v284 = vsel %vm81, %v276, 0
  %v287 = vsel %vm81, %v279, 0
  %v290 = vsel %vm81, %v282, 0
  %292 = vmatpush.msra.mxu0 %v49
  %293 = vmatpush.msra.mxu0 %v48
  %294 = vmatpush.msra.mxu0 %v47
  %295 = vmatpush.msra.mxu0 %v46
  %296 = vmatpush.msra.mxu0 %v45
  %297 = vmatpush.msra.mxu0 %v44
  %298 = vmatpush.msra.mxu0 %v43
  %299 = vmatpush.msra.mxu0 %v42
  %300 = vmatpush.msra.mxu0 %v41
  %301 = vmatpush.msra.mxu0 %v40
  %302 = vmatpush.msra.mxu0 %v39
  %303 = vmatpush.msra.mxu0 %v38
  %304 = vmatpush.msra.mxu0 %v37
  %305 = vmatpush.msra.mxu0 %v36
  %306 = vmatpush.msra.mxu0 %v35
  %307 = vmatpush.msra.mxu0 %v34
  %308 = vmatmul.f32.gmra.mxu0 %v274
  %v309 = vpop.f32.mrf.mxu0
  %v310 = vadd.f32 0.0, %v309
  %311 = vmatmul.f32.gmra.mxu0 %v277
  %v312 = vpop.f32.mrf.mxu0
  %v313 = vadd.f32 0.0, %v312
  %314 = vmatmul.f32.gmra.mxu0 %v280
  %v315 = vpop.f32.mrf.mxu0
  %v316 = vadd.f32 0.0, %v315
  %317 = vdwg.mxu0
  %318 = vmatpush.msra.mxu0 %v65
  %319 = vmatpush.msra.mxu0 %v64
  %320 = vmatpush.msra.mxu0 %v63
  %321 = vmatpush.msra.mxu0 %v62
  %322 = vmatpush.msra.mxu0 %v61
  %323 = vmatpush.msra.mxu0 %v60
  %324 = vmatpush.msra.mxu0 %v59
  %325 = vmatpush.msra.mxu0 %v58
  %326 = vmatpush.msra.mxu0 %v57
  %327 = vmatpush.msra.mxu0 %v56
  %328 = vmatpush.msra.mxu0 %v55
  %329 = vmatpush.msra.mxu0 %v54
  %330 = vmatpush.msra.mxu0 %v53
  %331 = vmatpush.msra.mxu0 %v52
  %332 = vmatpush.msra.mxu0 %v51
  %333 = vmatpush.msra.mxu0 %v50
  %334 = vmatmul.f32.gmra.mxu0 %v275
  %v335 = vpop.f32.mrf.mxu0
  %v336 = vadd.f32 %v310, %v335
  %337 = vmatmul.f32.gmra.mxu0 %v278
  %v338 = vpop.f32.mrf.mxu0
  %v339 = vadd.f32 %v313, %v338
  %340 = vmatmul.f32.gmra.mxu0 %v281
  %v341 = vpop.f32.mrf.mxu0
  %v342 = vadd.f32 %v316, %v341
  %343 = vdwg.mxu0
  %344 = vmatpush.msra.mxu0 0.0
  %345 = vmatpush.msra.mxu0 0.0
  %346 = vmatpush.msra.mxu0 0.0
  %347 = vmatpush.msra.mxu0 0.0
  %348 = vmatpush.msra.mxu0 0.0
  %349 = vmatpush.msra.mxu0 0.0
  %350 = vmatpush.msra.mxu0 0.0
  %351 = vmatpush.msra.mxu0 0.0
  %352 = vmatpush.msra.mxu0 0.0
  %353 = vmatpush.msra.mxu0 0.0
  %354 = vmatpush.msra.mxu0 %v93
  %355 = vmatpush.msra.mxu0 %v70
  %356 = vmatpush.msra.mxu0 %v69
  %357 = vmatpush.msra.mxu0 %v68
  %358 = vmatpush.msra.mxu0 %v67
  %359 = vmatpush.msra.mxu0 %v66
  %360 = vmatmul.f32.gmra.mxu0 %v284
  %v361 = vpop.f32.mrf.mxu0
  %v362 = vadd.f32 %v336, %v361
  %363 = vmatmul.f32.gmra.mxu0 %v287
  %v364 = vpop.f32.mrf.mxu0
  %v365 = vadd.f32 %v339, %v364
  %366 = vmatmul.f32.gmra.mxu0 %v290
  %v367 = vpop.f32.mrf.mxu0
  %v368 = vadd.f32 %v342, %v367
  %369 = vdwg.mxu0
  %v370 = vmax.f32 %v270, %v362
  %v371 = vmax.f32 %v271, %v365
  %v372 = vmax.f32 %v272, %v368
  %s373 = scalar_lea.vmem %s0, 216
  %v374 = vld [vmem:[%s373] sm:$0xff]
  %v375 = vld [vmem:[%s373 + $0x8] sm:$0xff]
  %v376 = vld [vmem:[%s373 + $0x10] sm:$0xff]
  %v377 = vld [vmem:[%s373 + $0x18] sm:$0xff]
  %v378 = vld [vmem:[%s373 + $0x20] sm:$0xff]
  %v379 = vld [vmem:[%s373 + $0x28] sm:$0xff]
  %v380 = vld [vmem:[%s373 + $0x30] sm:$0xff]
  %v381 = vld [vmem:[%s373 + $0x38] sm:$0xff]
  %v382 = vld [vmem:[%s373 + $0x40] sm:$0xff]
  %v384 = vsel %vm81, %v376, 0
  %v387 = vsel %vm81, %v379, 0
  %v390 = vsel %vm81, %v382, 0
  %392 = vmatpush.msra.mxu0 %v49
  %393 = vmatpush.msra.mxu0 %v48
  %394 = vmatpush.msra.mxu0 %v47
  %395 = vmatpush.msra.mxu0 %v46
  %396 = vmatpush.msra.mxu0 %v45
  %397 = vmatpush.msra.mxu0 %v44
  %398 = vmatpush.msra.mxu0 %v43
  %399 = vmatpush.msra.mxu0 %v42
  %400 = vmatpush.msra.mxu0 %v41
  %401 = vmatpush.msra.mxu0 %v40
  %402 = vmatpush.msra.mxu0 %v39
  %403 = vmatpush.msra.mxu0 %v38
  %404 = vmatpush.msra.mxu0 %v37
  %405 = vmatpush.msra.mxu0 %v36
  %406 = vmatpush.msra.mxu0 %v35
  %407 = vmatpush.msra.mxu0 %v34
  %408 = vmatmul.f32.gmra.mxu0 %v374
  %v409 = vpop.f32.mrf.mxu0
  %v410 = vadd.f32 0.0, %v409
  %411 = vmatmul.f32.gmra.mxu0 %v377
  %v412 = vpop.f32.mrf.mxu0
  %v413 = vadd.f32 0.0, %v412
  %414 = vmatmul.f32.gmra.mxu0 %v380
  %v415 = vpop.f32.mrf.mxu0
  %v416 = vadd.f32 0.0, %v415
  %417 = vdwg.mxu0
  %418 = vmatpush.msra.mxu0 %v65
  %419 = vmatpush.msra.mxu0 %v64
  %420 = vmatpush.msra.mxu0 %v63
  %421 = vmatpush.msra.mxu0 %v62
  %422 = vmatpush.msra.mxu0 %v61
  %423 = vmatpush.msra.mxu0 %v60
  %424 = vmatpush.msra.mxu0 %v59
  %425 = vmatpush.msra.mxu0 %v58
  %426 = vmatpush.msra.mxu0 %v57
  %427 = vmatpush.msra.mxu0 %v56
  %428 = vmatpush.msra.mxu0 %v55
  %429 = vmatpush.msra.mxu0 %v54
  %430 = vmatpush.msra.mxu0 %v53
  %431 = vmatpush.msra.mxu0 %v52
  %432 = vmatpush.msra.mxu0 %v51
  %433 = vmatpush.msra.mxu0 %v50
  %434 = vmatmul.f32.gmra.mxu0 %v375
  %v435 = vpop.f32.mrf.mxu0
  %v436 = vadd.f32 %v410, %v435
  %437 = vmatmul.f32.gmra.mxu0 %v378
  %v438 = vpop.f32.mrf.mxu0
  %v439 = vadd.f32 %v413, %v438
  %440 = vmatmul.f32.gmra.mxu0 %v381
  %v441 = vpop.f32.mrf.mxu0
  %v442 = vadd.f32 %v416, %v441
  %443 = vdwg.mxu0
  %444 = vmatpush.msra.mxu0 0.0
  %445 = vmatpush.msra.mxu0 0.0
  %446 = vmatpush.msra.mxu0 0.0
  %447 = vmatpush.msra.mxu0 0.0
  %448 = vmatpush.msra.mxu0 0.0
  %449 = vmatpush.msra.mxu0 0.0
  %450 = vmatpush.msra.mxu0 0.0
  %451 = vmatpush.msra.mxu0 0.0
  %452 = vmatpush.msra.mxu0 0.0
  %453 = vmatpush.msra.mxu0 0.0
  %454 = vmatpush.msra.mxu0 %v93
  %455 = vmatpush.msra.mxu0 %v70
  %456 = vmatpush.msra.mxu0 %v69
  %457 = vmatpush.msra.mxu0 %v68
  %458 = vmatpush.msra.mxu0 %v67
  %459 = vmatpush.msra.mxu0 %v66
  %460 = vmatmul.f32.gmra.mxu0 %v384
  %v461 = vpop.f32.mrf.mxu0
  %v462 = vadd.f32 %v436, %v461
  %463 = vmatmul.f32.gmra.mxu0 %v387
  %v464 = vpop.f32.mrf.mxu0
  %v465 = vadd.f32 %v439, %v464
  %466 = vmatmul.f32.gmra.mxu0 %v390
  %v467 = vpop.f32.mrf.mxu0
  %v468 = vadd.f32 %v442, %v467
  %469 = vdwg.mxu0
  %v470 = vmax.f32 %v370, %v462
  %v471 = vmax.f32 %v371, %v465
  %v472 = vmax.f32 %v372, %v468
  %v473 = vld [vmem:[%s2] sm:$0x1]
  %v475 = vperm.slane %v473, 0
  %v477 = vadd.f32 %v470, %v475
  %v478 = vadd.f32 %v471, %v475
  %v479 = vadd.f32 %v472, %v475
  %v480 = vmax.f32 %v477, 0.0
  %v481 = vmax.f32 %v478, 0.0
  %v482 = vmax.f32 %v479, 0.0
  %v483 = vld [vmem:[%s3] sm:$0xff]
  %v484 = vld [vmem:[%s3 + $0x8] sm:$0xff]
  %v485 = vld [vmem:[%s3 + $0x10] sm:$0xff]
  %v486 = vld [vmem:[%s3 + $0x18] sm:$0xff]
  %v487 = vld [vmem:[%s3 + $0x20] sm:$0xff]
  %v488 = vld [vmem:[%s3 + $0x28] sm:$0xff]
  %v489 = vld [vmem:[%s3 + $0x30] sm:$0xff]
  %v490 = vld [vmem:[%s3 + $0x38] sm:$0xff]
  %v491 = vld [vmem:[%s3 + $0x40] sm:$0xff]
  %v492 = vld [vmem:[%s3 + $0x48] sm:$0xff]
  %v493 = vld [vmem:[%s3 + $0x50] sm:$0xff]
  %v494 = vld [vmem:[%s3 + $0x58] sm:$0xff]
  %s495 = scalar_lea.vmem %s3, 96
  %v496 = vld [vmem:[%s495] sm:$0xff]
  %v497 = vld [vmem:[%s495 + $0x8] sm:$0xff]
  %v498 = vld [vmem:[%s495 + $0x10] sm:$0xff]
  %v499 = vld [vmem:[%s495 + $0x18] sm:$0xff]
  %v500 = vld [vmem:[%s495 + $0x20] sm:$0xff]
  %v501 = vld [vmem:[%s495 + $0x28] sm:$0xff]
  %v502 = vld [vmem:[%s495 + $0x30] sm:$0xff]
  %v503 = vld [vmem:[%s495 + $0x38] sm:$0xff]
  %v504 = vld [vmem:[%s495 + $0x40] sm:$0xff]
  %v505 = vld [vmem:[%s495 + $0x48] sm:$0xff]
  %v506 = vld [vmem:[%s495 + $0x50] sm:$0xff]
  %v507 = vld [vmem:[%s495 + $0x58] sm:$0xff]
  %vm510 = vcmask 1046528
  %v511 = vrot.slane %v480, 1
  %v512 = vrot.slane %v481, 1
  %v513 = vsel %vm510, %v511, %v512
  %vm514 = vcmask 785408
  %v515 = vsel %vm514, %v513, 0
  %517 = vmatpush.msra.mxu0 0.0
  %518 = vmatpush.msra.mxu0 0.0
  %519 = vmatpush.msra.mxu0 0.0
  %520 = vmatpush.msra.mxu0 0.0
  %521 = vmatpush.msra.mxu0 %v507
  %522 = vmatpush.msra.mxu0 %v506
  %523 = vmatpush.msra.mxu0 %v505
  %524 = vmatpush.msra.mxu0 %v504
  %525 = vmatpush.msra.mxu0 %v503
  %526 = vmatpush.msra.mxu0 %v502
  %527 = vmatpush.msra.mxu0 %v501
  %528 = vmatpush.msra.mxu0 %v500
  %529 = vmatpush.msra.mxu0 %v499
  %530 = vmatpush.msra.mxu0 %v498
  %531 = vmatpush.msra.mxu0 %v497
  %532 = vmatpush.msra.mxu0 %v496
  %533 = vmatmul.f32.gmra.mxu0 %v515
  %v534 = vpop.f32.mrf.mxu0
  %v535 = vadd.f32 0.0, %v534
  %536 = vdwg.mxu0
  %v537 = vsel %vm514, %v480, 0
  %539 = vmatpush.msra.mxu0 0.0
  %540 = vmatpush.msra.mxu0 0.0
  %541 = vmatpush.msra.mxu0 0.0
  %542 = vmatpush.msra.mxu0 0.0
  %543 = vmatpush.msra.mxu0 %v494
  %544 = vmatpush.msra.mxu0 %v493
  %545 = vmatpush.msra.mxu0 %v492
  %546 = vmatpush.msra.mxu0 %v491
  %547 = vmatpush.msra.mxu0 %v490
  %548 = vmatpush.msra.mxu0 %v489
  %549 = vmatpush.msra.mxu0 %v488
  %550 = vmatpush.msra.mxu0 %v487
  %551 = vmatpush.msra.mxu0 %v486
  %552 = vmatpush.msra.mxu0 %v485
  %553 = vmatpush.msra.mxu0 %v484
  %554 = vmatpush.msra.mxu0 %v483
  %555 = vmatmul.f32.gmra.mxu0 %v537
  %v556 = vpop.f32.mrf.mxu0
  %v557 = vadd.f32 %v535, %v556
  %558 = vdwg.mxu0
  %s559 = scalar_lea.vmem %s3, 192
  %v560 = vld [vmem:[%s559] sm:$0xff]
  %v561 = vld [vmem:[%s559 + $0x8] sm:$0xff]
  %v562 = vld [vmem:[%s559 + $0x10] sm:$0xff]
  %v563 = vld [vmem:[%s559 + $0x18] sm:$0xff]
  %v564 = vld [vmem:[%s559 + $0x20] sm:$0xff]
  %v565 = vld [vmem:[%s559 + $0x28] sm:$0xff]
  %v566 = vld [vmem:[%s559 + $0x30] sm:$0xff]
  %v567 = vld [vmem:[%s559 + $0x38] sm:$0xff]
  %v568 = vld [vmem:[%s559 + $0x40] sm:$0xff]
  %v569 = vld [vmem:[%s559 + $0x48] sm:$0xff]
  %v570 = vld [vmem:[%s559 + $0x50] sm:$0xff]
  %v571 = vld [vmem:[%s559 + $0x58] sm:$0xff]
  %vm572 = vcmask 1045504
  %v573 = vrot.slane %v480, 2
  %v574 = vrot.slane %v481, 2
  %v575 = vsel %vm572, %v573, %v574
  %v576 = vsel %vm514, %v575, 0
  %578 = vmatpush.msra.mxu0 0.0
  %579 = vmatpush.msra.mxu0 0.0
  %580 = vmatpush.msra.mxu0 0.0
  %581 = vmatpush.msra.mxu0 0.0
  %582 = vmatpush.msra.mxu0 %v571
  %583 = vmatpush.msra.mxu0 %v570
  %584 = vmatpush.msra.mxu0 %v569
  %585 = vmatpush.msra.mxu0 %v568
  %586 = vmatpush.msra.mxu0 %v567
  %587 = vmatpush.msra.mxu0 %v566
  %588 = vmatpush.msra.mxu0 %v565
  %589 = vmatpush.msra.mxu0 %v564
  %590 = vmatpush.msra.mxu0 %v563
  %591 = vmatpush.msra.mxu0 %v562
  %592 = vmatpush.msra.mxu0 %v561
  %593 = vmatpush.msra.mxu0 %v560
  %594 = vmatmul.f32.gmra.mxu0 %v576
  %v595 = vpop.f32.mrf.mxu0
  %v596 = vadd.f32 0.0, %v595
  %597 = vdwg.mxu0
  %v598 = vadd.f32 %v557, %v596
  %s599 = scalar_lea.vmem %s3, 288
  %v600 = vld [vmem:[%s599] sm:$0xff]
  %v601 = vld [vmem:[%s599 + $0x8] sm:$0xff]
  %v602 = vld [vmem:[%s599 + $0x10] sm:$0xff]
  %v603 = vld [vmem:[%s599 + $0x18] sm:$0xff]
  %v604 = vld [vmem:[%s599 + $0x20] sm:$0xff]
  %v605 = vld [vmem:[%s599 + $0x28] sm:$0xff]
  %v606 = vld [vmem:[%s599 + $0x30] sm:$0xff]
  %v607 = vld [vmem:[%s599 + $0x38] sm:$0xff]
  %v608 = vld [vmem:[%s599 + $0x40] sm:$0xff]
  %v609 = vld [vmem:[%s599 + $0x48] sm:$0xff]
  %v610 = vld [vmem:[%s599 + $0x50] sm:$0xff]
  %v611 = vld [vmem:[%s599 + $0x58] sm:$0xff]
  %vm612 = vcmask 1044480
  %v613 = vrot.slane %v480, 3
  %v614 = vrot.slane %v481, 3
  %v615 = vsel %vm612, %v613, %v614
  %v616 = vsel %vm514, %v615, 0
  %618 = vmatpush.msra.mxu0 0.0
  %619 = vmatpush.msra.mxu0 0.0
  %620 = vmatpush.msra.mxu0 0.0
  %621 = vmatpush.msra.mxu0 0.0
  %622 = vmatpush.msra.mxu0 %v611
  %623 = vmatpush.msra.mxu0 %v610
  %624 = vmatpush.msra.mxu0 %v609
  %625 = vmatpush.msra.mxu0 %v608
  %626 = vmatpush.msra.mxu0 %v607
  %627 = vmatpush.msra.mxu0 %v606
  %628 = vmatpush.msra.mxu0 %v605
  %629 = vmatpush.msra.mxu0 %v604
  %630 = vmatpush.msra.mxu0 %v603
  %631 = vmatpush.msra.mxu0 %v602
  %632 = vmatpush.msra.mxu0 %v601
  %633 = vmatpush.msra.mxu0 %v600
  %634 = vmatmul.f32.gmra.mxu0 %v616
  %v635 = vpop.f32.mrf.mxu0
  %v636 = vadd.f32 0.0, %v635
  %637 = vdwg.mxu0
  %v638 = vadd.f32 %v598, %v636
  %s639 = scalar_lea.vmem %s3, 384
  %v640 = vld [vmem:[%s639] sm:$0xff]
  %v641 = vld [vmem:[%s639 + $0x8] sm:$0xff]
  %v642 = vld [vmem:[%s639 + $0x10] sm:$0xff]
  %v643 = vld [vmem:[%s639 + $0x18] sm:$0xff]
  %v644 = vld [vmem:[%s639 + $0x20] sm:$0xff]
  %v645 = vld [vmem:[%s639 + $0x28] sm:$0xff]
  %v646 = vld [vmem:[%s639 + $0x30] sm:$0xff]
  %v647 = vld [vmem:[%s639 + $0x38] sm:$0xff]
  %v648 = vld [vmem:[%s639 + $0x40] sm:$0xff]
  %v649 = vld [vmem:[%s639 + $0x48] sm:$0xff]
  %v650 = vld [vmem:[%s639 + $0x50] sm:$0xff]
  %v651 = vld [vmem:[%s639 + $0x58] sm:$0xff]
  %v652 = vrot.slane %v480, 4
  %v653 = vrot.slane %v481, 4
  %v654 = vsel %vm91, %v652, %v653
  %v655 = vsel %vm514, %v654, 0
  %657 = vmatpush.msra.mxu0 0.0
  %658 = vmatpush.msra.mxu0 0.0
  %659 = vmatpush.msra.mxu0 0.0
  %660 = vmatpush.msra.mxu0 0.0
  %661 = vmatpush.msra.mxu0 %v651
  %662 = vmatpush.msra.mxu0 %v650
  %663 = vmatpush.msra.mxu0 %v649
  %664 = vmatpush.msra.mxu0 %v648
  %665 = vmatpush.msra.mxu0 %v647
  %666 = vmatpush.msra.mxu0 %v646
  %667 = vmatpush.msra.mxu0 %v645
  %668 = vmatpush.msra.mxu0 %v644
  %669 = vmatpush.msra.mxu0 %v643
  %670 = vmatpush.msra.mxu0 %v642
  %671 = vmatpush.msra.mxu0 %v641
  %672 = vmatpush.msra.mxu0 %v640
  %673 = vmatmul.f32.gmra.mxu0 %v655
  %v674 = vpop.f32.mrf.mxu0
  %v675 = vadd.f32 0.0, %v674
  %676 = vdwg.mxu0
  %v677 = vadd.f32 %v638, %v675
  %v678 = vld [vmem:[%s4] sm:$0x1]
  %v680 = vperm.slane %v678, 0
  %v682 = vadd.f32 %v677, %v680
  %v684 = vrot.slane %v682, 1
  %v686 = vmax.f32 %v682, %v684
  %v688 = vrot.slane %v686, 1
  %v690 = vrot.slane %v686, 2
  %v692 = vrot.slane %v686, 3
  %vm694 = vcmask 1040384
  %v695 = vsel %vm694, %v686, %v688
  %vm696 = vcmask 1041408
  %v697 = vsel %vm696, %v695, %v690
  %vm698 = vcmask 1042432
  %v699 = vsel %vm698, %v697, %v692
  %701 = vrot.lane.b32.xlu0 %v699, 96
  %v702 = vpop.permute.xlu0 %701
  %v704 = vmax.f32 %v699, %v702
  %v705 = vmax.f32 %v704, 0.0
  %v707 = vrot.slane %v481, 5
  %v708 = vrot.slane %v482, 5
  %v709 = vsel %vm698, %v707, %v708
  %v710 = vsel %vm514, %v709, 0
  %712 = vmatpush.msra.mxu0 0.0
  %713 = vmatpush.msra.mxu0 0.0
  %714 = vmatpush.msra.mxu0 0.0
  %715 = vmatpush.msra.mxu0 0.0
  %716 = vmatpush.msra.mxu0 %v507
  %717 = vmatpush.msra.mxu0 %v506
  %718 = vmatpush.msra.mxu0 %v505
  %719 = vmatpush.msra.mxu0 %v504
  %720 = vmatpush.msra.mxu0 %v503
  %721 = vmatpush.msra.mxu0 %v502
  %722 = vmatpush.msra.mxu0 %v501
  %723 = vmatpush.msra.mxu0 %v500
  %724 = vmatpush.msra.mxu0 %v499
  %725 = vmatpush.msra.mxu0 %v498
  %726 = vmatpush.msra.mxu0 %v497
  %727 = vmatpush.msra.mxu0 %v496
  %728 = vmatmul.f32.gmra.mxu0 %v710
  %v729 = vpop.f32.mrf.mxu0
  %v730 = vadd.f32 0.0, %v729
  %731 = vdwg.mxu0
  %v732 = vrot.slane %v482, 4
  %v733 = vsel %vm91, %v653, %v732
  %v734 = vsel %vm514, %v733, 0
  %736 = vmatpush.msra.mxu0 0.0
  %737 = vmatpush.msra.mxu0 0.0
  %738 = vmatpush.msra.mxu0 0.0
  %739 = vmatpush.msra.mxu0 0.0
  %740 = vmatpush.msra.mxu0 %v494
  %741 = vmatpush.msra.mxu0 %v493
  %742 = vmatpush.msra.mxu0 %v492
  %743 = vmatpush.msra.mxu0 %v491
  %744 = vmatpush.msra.mxu0 %v490
  %745 = vmatpush.msra.mxu0 %v489
  %746 = vmatpush.msra.mxu0 %v488
  %747 = vmatpush.msra.mxu0 %v487
  %748 = vmatpush.msra.mxu0 %v486
  %749 = vmatpush.msra.mxu0 %v485
  %750 = vmatpush.msra.mxu0 %v484
  %751 = vmatpush.msra.mxu0 %v483
  %752 = vmatmul.f32.gmra.mxu0 %v734
  %v753 = vpop.f32.mrf.mxu0
  %v754 = vadd.f32 %v730, %v753
  %755 = vdwg.mxu0
  %v756 = vrot.slane %v481, 6
  %v757 = vrot.slane %v482, 6
  %v758 = vsel %vm696, %v756, %v757
  %v759 = vsel %vm514, %v758, 0
  %761 = vmatpush.msra.mxu0 0.0
  %762 = vmatpush.msra.mxu0 0.0
  %763 = vmatpush.msra.mxu0 0.0
  %764 = vmatpush.msra.mxu0 0.0
  %765 = vmatpush.msra.mxu0 %v571
  %766 = vmatpush.msra.mxu0 %v570
  %767 = vmatpush.msra.mxu0 %v569
  %768 = vmatpush.msra.mxu0 %v568
  %769 = vmatpush.msra.mxu0 %v567
  %770 = vmatpush.msra.mxu0 %v566
  %771 = vmatpush.msra.mxu0 %v565
  %772 = vmatpush.msra.mxu0 %v564
  %773 = vmatpush.msra.mxu0 %v563
  %774 = vmatpush.msra.mxu0 %v562
  %775 = vmatpush.msra.mxu0 %v561
  %776 = vmatpush.msra.mxu0 %v560
  %777 = vmatmul.f32.gmra.mxu0 %v759
  %v778 = vpop.f32.mrf.mxu0
  %v779 = vadd.f32 0.0, %v778
  %780 = vdwg.mxu0
  %v781 = vadd.f32 %v754, %v779
  %v782 = vrot.slane %v481, 7
  %v783 = vrot.slane %v482, 7
  %v784 = vsel %vm694, %v782, %v783
  %v785 = vsel %vm514, %v784, 0
  %787 = vmatpush.msra.mxu0 0.0
  %788 = vmatpush.msra.mxu0 0.0
  %789 = vmatpush.msra.mxu0 0.0
  %790 = vmatpush.msra.mxu0 0.0
  %791 = vmatpush.msra.mxu0 %v611
  %792 = vmatpush.msra.mxu0 %v610
  %793 = vmatpush.msra.mxu0 %v609
  %794 = vmatpush.msra.mxu0 %v608
  %795 = vmatpush.msra.mxu0 %v607
  %796 = vmatpush.msra.mxu0 %v606
  %797 = vmatpush.msra.mxu0 %v605
  %798 = vmatpush.msra.mxu0 %v604
  %799 = vmatpush.msra.mxu0 %v603
  %800 = vmatpush.msra.mxu0 %v602
  %801 = vmatpush.msra.mxu0 %v601
  %802 = vmatpush.msra.mxu0 %v600
  %803 = vmatmul.f32.gmra.mxu0 %v785
  %v804 = vpop.f32.mrf.mxu0
  %v805 = vadd.f32 0.0, %v804
  %806 = vdwg.mxu0
  %v807 = vadd.f32 %v781, %v805
  %v808 = vsel %vm514, %v482, 0
  %810 = vmatpush.msra.mxu0 0.0
  %811 = vmatpush.msra.mxu0 0.0
  %812 = vmatpush.msra.mxu0 0.0
  %813 = vmatpush.msra.mxu0 0.0
  %814 = vmatpush.msra.mxu0 %v651
  %815 = vmatpush.msra.mxu0 %v650
  %816 = vmatpush.msra.mxu0 %v649
  %817 = vmatpush.msra.mxu0 %v648
  %818 = vmatpush.msra.mxu0 %v647
  %819 = vmatpush.msra.mxu0 %v646
  %820 = vmatpush.msra.mxu0 %v645
  %821 = vmatpush.msra.mxu0 %v644
  %822 = vmatpush.msra.mxu0 %v643
  %823 = vmatpush.msra.mxu0 %v642
  %824 = vmatpush.msra.mxu0 %v641
  %825 = vmatpush.msra.mxu0 %v640
  %826 = vmatmul.f32.gmra.mxu0 %v808
  %v827 = vpop.f32.mrf.mxu0
  %v828 = vadd.f32 0.0, %v827
  %829 = vdwg.mxu0
  %v830 = vadd.f32 %v807, %v828
  %v831 = vadd.f32 %v830, %v680
  %v833 = vrot.slane %v831, 1
  %v835 = vmax.f32 %v831, %v833
  %v837 = vrot.slane %v835, 1
  %v839 = vrot.slane %v835, 2
  %v841 = vrot.slane %v835, 3
  %v843 = vsel %vm694, %v835, %v837
  %v844 = vsel %vm696, %v843, %v839
  %v845 = vsel %vm698, %v844, %v841
  %847 = vrot.lane.b32.xlu0 %v845, 96
  %v848 = vpop.permute.xlu0 %847
  %v850 = vmax.f32 %v845, %v848
  %v851 = vmax.f32 %v850, 0.0
  %v853 = vrot.slane %v851, 7
  %v855 = vsel %vm694, %v705, %v853
  %v856 = vld [vmem:[%s5] sm:$0xff]
  %v857 = vld [vmem:[%s5 + $0x8] sm:$0xff]
  %v858 = vld [vmem:[%s5 + $0x10] sm:$0xff]
  %v859 = vld [vmem:[%s5 + $0x18] sm:$0xff]
  %v861 = vrot.slane %v705, 1
  %v863 = vsel %vm694, %v861, %v851
  %s864 = scalar_lea.vmem %s5, 32
  %v865 = vld [vmem:[%s864] sm:$0xff]
  %v866 = vld [vmem:[%s864 + $0x8] sm:$0xff]
  %v867 = vld [vmem:[%s864 + $0x10] sm:$0xff]
  %v868 = vld [vmem:[%s864 + $0x18] sm:$0xff]
  %vm869 = vcmask 261120
  %v871 = vsel %vm869, %v863, 0
  %873 = vmatpush.msra.mxu0 0.0
  %874 = vmatpush.msra.mxu0 0.0
  %875 = vmatpush.msra.mxu0 0.0
  %876 = vmatpush.msra.mxu0 0.0
  %877 = vmatpush.msra.mxu0 0.0
  %878 = vmatpush.msra.mxu0 0.0
  %879 = vmatpush.msra.mxu0 0.0
  %880 = vmatpush.msra.mxu0 0.0
  %881 = vmatpush.msra.mxu0 0.0
  %882 = vmatpush.msra.mxu0 0.0
  %883 = vmatpush.msra.mxu0 0.0
  %884 = vmatpush.msra.mxu0 0.0
  %885 = vmatpush.msra.mxu0 %v868
  %886 = vmatpush.msra.mxu0 %v867
  %887 = vmatpush.msra.mxu0 %v866
  %888 = vmatpush.msra.mxu0 %v865
  %889 = vmatmul.f32.gmra.mxu0 %v871
  %v890 = vpop.f32.mrf.mxu0
  %v891 = vadd.f32 0.0, %v890
  %892 = vdwg.mxu0
  %v894 = vsel %vm869, %v855, 0
  %896 = vmatpush.msra.mxu0 0.0
  %897 = vmatpush.msra.mxu0 0.0
  %898 = vmatpush.msra.mxu0 0.0
  %899 = vmatpush.msra.mxu0 0.0
  %900 = vmatpush.msra.mxu0 0.0
  %901 = vmatpush.msra.mxu0 0.0
  %902 = vmatpush.msra.mxu0 0.0
  %903 = vmatpush.msra.mxu0 0.0
  %904 = vmatpush.msra.mxu0 0.0
  %905 = vmatpush.msra.mxu0 0.0
  %906 = vmatpush.msra.mxu0 0.0
  %907 = vmatpush.msra.mxu0 0.0
  %908 = vmatpush.msra.mxu0 %v859
  %909 = vmatpush.msra.mxu0 %v858
  %910 = vmatpush.msra.mxu0 %v857
  %911 = vmatpush.msra.mxu0 %v856
  %912 = vmatmul.f32.gmra.mxu0 %v894
  %v913 = vpop.f32.mrf.mxu0
  %v914 = vadd.f32 %v891, %v913
  %915 = vdwg.mxu0
  %v916 = vrot.slane %v705, 2
  %v918 = vrot.slane %v851, 1
  %v920 = vsel %vm694, %v916, %v918
  %s921 = scalar_lea.vmem %s5, 64
  %v922 = vld [vmem:[%s921] sm:$0xff]
  %v923 = vld [vmem:[%s921 + $0x8] sm:$0xff]
  %v924 = vld [vmem:[%s921 + $0x10] sm:$0xff]
  %v925 = vld [vmem:[%s921 + $0x18] sm:$0xff]
  %v927 = vsel %vm869, %v920, 0
  %929 = vmatpush.msra.mxu0 0.0
  %930 = vmatpush.msra.mxu0 0.0
  %931 = vmatpush.msra.mxu0 0.0
  %932 = vmatpush.msra.mxu0 0.0
  %933 = vmatpush.msra.mxu0 0.0
  %934 = vmatpush.msra.mxu0 0.0
  %935 = vmatpush.msra.mxu0 0.0
  %936 = vmatpush.msra.mxu0 0.0
  %937 = vmatpush.msra.mxu0 0.0
  %938 = vmatpush.msra.mxu0 0.0
  %939 = vmatpush.msra.mxu0 0.0
  %940 = vmatpush.msra.mxu0 0.0
  %941 = vmatpush.msra.mxu0 %v925
  %942 = vmatpush.msra.mxu0 %v924
  %943 = vmatpush.msra.mxu0 %v923
  %944 = vmatpush.msra.mxu0 %v922
  %945 = vmatmul.f32.gmra.mxu0 %v927
  %v946 = vpop.f32.mrf.mxu0
  %v947 = vadd.f32 0.0, %v946
  %948 = vdwg.mxu0
  %v949 = vadd.f32 %v914, %v947
  %v950 = vrot.slane %v705, 3
  %v952 = vrot.slane %v851, 2
  %v954 = vsel %vm694, %v950, %v952
  %s955 = scalar_lea.vmem %s5, 96
  %v956 = vld [vmem:[%s955] sm:$0xff]
  %v957 = vld [vmem:[%s955 + $0x8] sm:$0xff]
  %v958 = vld [vmem:[%s955 + $0x10] sm:$0xff]
  %v959 = vld [vmem:[%s955 + $0x18] sm:$0xff]
  %v961 = vsel %vm869, %v954, 0
  %963 = vmatpush.msra.mxu0 0.0
  %964 = vmatpush.msra.mxu0 0.0
  %965 = vmatpush.msra.mxu0 0.0
  %966 = vmatpush.msra.mxu0 0.0
  %967 = vmatpush.msra.mxu0 0.0
  %968 = vmatpush.msra.mxu0 0.0
  %969 = vmatpush.msra.mxu0 0.0
  %970 = vmatpush.msra.mxu0 0.0
  %971 = vmatpush.msra.mxu0 0.0
  %972 = vmatpush.msra.mxu0 0.0
  %973 = vmatpush.msra.mxu0 0.0
  %974 = vmatpush.msra.mxu0 0.0
  %975 = vmatpush.msra.mxu0 %v959
  %976 = vmatpush.msra.mxu0 %v958
  %977 = vmatpush.msra.mxu0 %v957
  %978 = vmatpush.msra.mxu0 %v956
  %979 = vmatmul.f32.gmra.mxu0 %v961
  %v980 = vpop.f32.mrf.mxu0
  %v981 = vadd.f32 0.0, %v980
  %982 = vdwg.mxu0
  %v983 = vadd.f32 %v949, %v981
  %v984 = vld [vmem:[%s6] sm:$0x1]
  %v986 = vperm.slane %v984, 0
  %v988 = vadd.f32 %v983, %v986
  %v989 = vmax.f32 %v988, 0.0
  %v990 = vld [vmem:[%s7] sm:$0xff]
  %v991 = vld [vmem:[%s7 + $0x8] sm:$0x3]
  %v992 = vld [vmem:[#allocation2] sm:$0x1]
  %v994 = vperm.slane %v992, 0
  %vm996 = vcmask 80896
  %v998 = vsel %vm996, %v989, 0
  %v1001 = vsel %vm696, %v991, 0
  %1003 = vmatpush.msra.mxu0 0.0
  %1004 = vmatpush.msra.mxu0 0.0
  %1005 = vmatpush.msra.mxu0 0.0
  %1006 = vmatpush.msra.mxu0 0.0
  %1007 = vmatpush.msra.mxu0 0.0
  %1008 = vmatpush.msra.mxu0 0.0
  %1009 = vmatpush.msra.mxu0 0.0
  %1010 = vmatpush.msra.mxu0 0.0
  %1011 = vmatpush.msra.mxu0 0.0
  %1012 = vmatpush.msra.mxu0 0.0
  %1013 = vmatpush.msra.mxu0 0.0
  %1014 = vmatpush.msra.mxu0 0.0
  %1015 = vmatpush.msra.mxu0 0.0
  %1016 = vmatpush.msra.mxu0 0.0
  %1017 = vmatpush.msra.mxu0 %v1001
  %1018 = vmatpush.msra.mxu0 %v990
  %1019 = vmatmul.f32.gmra.mxu0 %v998
  %v1020 = vpop.f32.mrf.mxu0
  %v1021 = vadd.f32 %v994, %v1020
  %1022 = vdwg.mxu0
  %v1023 = vand.u32 2147483647, %v1021
  %v1024 = vsub.f32 0.0, %v1023
  %v1025 = vmul.f32 %v1024, 1.442695
  %v1026 = vpow.pop %v1025
  %vm1027 = vcmp.ge.f32.partialorder %v1021, 0.0
  %v1028 = vadd.f32 %v1026, 1.0
  %v1029 = vrcp.pop %v1028
  %v1030 = vmul.f32 %v1028, %v1029
  %v1031 = vsub.f32 1.0, %v1030
  %v1032 = vmul.f32 %v1029, %v1031
  %v1033 = vadd.f32 %v1029, %v1032
  %vm1034 = vweird.f32 %v1028
  %vm1035 = vweird.f32 %v1029
  %vm1036 = vmor %vm1034, %vm1035
  %v1037 = vsel %vm1036, %v1029, %v1033
  %v1038 = vand.u32 2147483647, %v1028
  %vm1039 = vcmp.eq.f32.partialorder %v1038, 8.507059e+37
  %v1040 = vand.u32 %v1028, 2147483648
  %v1041 = vor.u32 1.1754944e-38, %v1040
  %v1042 = vsel %vm1039, %v1041, %v1037
  %v1043 = vmul.f32 1.0, %v1042
  %v1044 = vmul.f32 %v1026, %v1042
  %v1045 = vsel %vm1027, %v1043, %v1044
  %vm1046 = vcmask 1024
  %1047 = vst.msk [vmem:[%s9] sm:$0x3] %vm1046, %v1045
  // Predicated region
  $region38: #{discriminator_forward.1} parent=0 // pred_check
    _
  $region39: #{discriminator_forward.1} parent=0 // pred_check_branch
    %1049 = sbr.rel (0) target = $region41
  $region40: #{discriminator_forward.1} parent=0 // pred_region
    _
  $region41: #{discriminator_forward.1} parent=0 // pred_fallthru
    _
  // Predicated region
  $region42: #{discriminator_forward.1} parent=0 // pred_check
    _
  $region43: #{discriminator_forward.1} parent=0 // pred_check_branch
    %1051 = sbr.rel (0) target = $region45
  $region44: #{discriminator_forward.1} parent=0 // pred_region
    _
  $region45: #{discriminator_forward.1} parent=0 // pred_fallthru
    _

</llo_original>
